<compile_context>
chip_gen: v5e
topology: v5e:2x2
jax: 0.10.0
libtpu: 0.0.40
codegen_flags: <defaults>
</compile_context>

<pallas_src>
import functools

import jax
import jax.numpy as jnp
import numpy as np
from jax.experimental import pallas as pl
from jax.experimental.pallas import tpu as pltpu


# ----------------------------------------------------------------------------
# Fused BottleNeck Pallas kernel (one grid step == one image)
# ----------------------------------------------------------------------------
def _bottleneck_kernel(x_ref, w1_ref, s1_ref, b1_ref,
                       w2_ref, s2_ref, b2_ref,
                       w3_ref, s3_ref, b3_ref,
                       o_ref, pad_ref, *, H, W, split, cd):
    HW = H * W
    ws = w2_ref.shape[-1]          # per-split channel width

    # Zero the halo scratch every step (required: grid axis is 'parallel').
    # Only the interior is rewritten per branch, so the 1-px border stays zero
    # and provides the conv padding (padding fused in-kernel, no HBM pads).
    pad_ref[...] = jnp.zeros(pad_ref.shape, pad_ref.dtype)

    # ---- 1x1 conv + folded BN + ReLU : one MXU matmul over all pixels ----
    y1 = jnp.dot(x_ref[...].astype(cd), w1_ref[...],
                 preferred_element_type=jnp.float32)
    y1 = jnp.maximum(y1 * s1_ref[...] + b1_ref[...], 0.0)        # (HW, bbc) f32

    # ---- Res2Net layer: shared 3x3 conv weights, sequential split chain ----
    s2 = s2_ref[...]
    b2 = b2_ref[...]
    w2 = w2_ref[...]                                             # (9*ws, ws)

    def conv3x3_bn_relu(t):                                      # t: (HW, ws) f32
        # write branch input into the zero-bordered halo scratch
        pad_ref[1:H + 1, 1:W + 1, :] = t.reshape(H, W, ws).astype(pad_ref.dtype)
        # im2col: nine shifted windows lane-concatenated -> one K=9*ws matmul
        cols = [pad_ref[dy:dy + H, dx:dx + W, :].reshape(HW, ws)
                for dy in range(3) for dx in range(3)]
        patches = jnp.concatenate(cols, axis=-1)                 # (HW, 9*ws)
        z = jnp.dot(patches, w2, preferred_element_type=jnp.float32)
        return jnp.maximum(z * s2 + b2, 0.0)                     # f32 epilogue

    outs = [y1[:, 0:ws]]
    ny = conv3x3_bn_relu(y1[:, ws:2 * ws])                       # first branch: no add
    outs.append(ny)
    for i in range(2, split):
        ny = conv3x3_bn_relu(ny + y1[:, i * ws:(i + 1) * ws])
        outs.append(ny)
    y2 = jnp.concatenate(outs, axis=-1)                          # (HW, bbc)

    # ---- 1x1 conv + folded BN (no activation) ----
    y3 = jnp.dot(y2.astype(cd), w3_ref[...],
                 preferred_element_type=jnp.float32)
    y3 = y3 * s3_ref[...] + b3_ref[...]
    o_ref[...] = y3.astype(o_ref.dtype)                          # lane-dense 4*bbc store


# ----------------------------------------------------------------------------
# BottleNeck forward (NCHW in / NCHW out; single fused pallas_call)
# ----------------------------------------------------------------------------
def bottleneck_forward(x_nchw, params, *, split=4, stride=1, use_bf16=False):
    x = jnp.transpose(x_nchw, (0, 2, 3, 1))          # NCHW -> NHWC (channels -> lanes)
    if stride > 1:
        x = x[:, ::stride, ::stride, :]              # stride-s 1x1 conv == subsample
    N, H, W, Cin = x.shape
    bbc = params["w1"].shape[1]
    assert bbc % split == 0
    ws = bbc // split
    Cout = params["w3"].shape[1]
    HW = H * W
    assert (HW % 8 == 0) or (N == 1), "H*W should be a multiple of 8 for tiling"

    # MXU operand dtype (bf16 on v6e/v7x if desired); epilogue stays f32.
    cd = jnp.bfloat16 if use_bf16 else x.dtype
    w1 = params["w1"].astype(cd)                                  # (Cin, bbc)
    w2 = params["w2"].reshape(9 * ws, ws).astype(cd)              # HWIO -> (9*ws, ws)
    w3 = params["w3"].astype(cd)                                  # (bbc, Cout)

    x2d = x.reshape(N * HW, Cin)                                  # rows = pixels

    kernel = functools.partial(_bottleneck_kernel, H=H, W=W, split=split, cd=cd)
    out2d = pl.pallas_call(
        kernel,
        out_shape=jax.ShapeDtypeStruct((N * HW, Cout), x.dtype),
        grid=(N,),
        in_specs=[
            pl.BlockSpec((HW, Cin), lambda n: (n, 0)),            # per-image pixel slab
            pl.BlockSpec((Cin, bbc), lambda n: (0, 0)),           # weights stay resident
            pl.BlockSpec((1, bbc), lambda n: (0, 0)),
            pl.BlockSpec((1, bbc), lambda n: (0, 0)),
            pl.BlockSpec((9 * ws, ws), lambda n: (0, 0)),
            pl.BlockSpec((1, ws), lambda n: (0, 0)),
            pl.BlockSpec((1, ws), lambda n: (0, 0)),
            pl.BlockSpec((bbc, Cout), lambda n: (0, 0)),
            pl.BlockSpec((1, Cout), lambda n: (0, 0)),
            pl.BlockSpec((1, Cout), lambda n: (0, 0)),
        ],
        out_specs=pl.BlockSpec((HW, Cout), lambda n: (n, 0)),
        scratch_shapes=[pltpu.VMEM((H + 2, W + 2, ws), cd)],      # halo pad scratch
        compiler_params=pltpu.CompilerParams(
            dimension_semantics=("parallel",),                    # megacore / v7x 2 TCs
            vmem_limit_bytes=48 * 1024 * 1024,                    # headroom under v7x 64 MiB
        ),
    )(x2d, w1,
      params["s1"].reshape(1, bbc), params["b1"].reshape(1, bbc),
      w2,
      params["s2"].reshape(1, ws), params["b2"].reshape(1, ws),
      w3,
      params["s3"].reshape(1, Cout), params["b3"].reshape(1, Cout))

    out = out2d.reshape(N, H, W, Cout)
    return jnp.transpose(out, (0, 3, 1, 2))                       # NHWC -> NCHW


# ----------------------------------------------------------------------------
# Pure-JAX reference (for correctness check)
# ----------------------------------------------------------------------------
def reference_forward(x_nchw, params, *, split=4, stride=1):
    x = jnp.transpose(x_nchw, (0, 2, 3, 1))
    if stride > 1:
        x = x[:, ::stride, ::stride, :]

    def c1(x, w, s, b, relu):
        y = jnp.einsum("nhwc,cd->nhwd", x, w) * s + b
        return jnp.maximum(y, 0.0) if relu else y

    def c3(x, w, s, b):
        y = jax.lax.conv_general_dilated(
            x, w, (1, 1), "SAME",
            dimension_numbers=("NHWC", "HWIO", "NHWC"))
        y = y * s + b
        return jnp.maximum(y, 0.0)

    y = c1(x, params["w1"], params["s1"], params["b1"], True)
    C = y.shape[-1]
    cw = C // split
    feats = [y[..., i * cw:(i + 1) * cw] for i in range(split)]
    outs = [feats[0]]
    ny = c3(feats[1], params["w2"], params["s2"], params["b2"])
    outs.append(ny)
    for i in range(2, split):
        ny = c3(ny + feats[i], params["w2"], params["s2"], params["b2"])
        outs.append(ny)
    y = jnp.concatenate(outs, axis=-1)
    y = c1(y, params["w3"], params["s3"], params["b3"], False)
    return jnp.transpose(y, (0, 3, 1, 2))


# ----------------------------------------------------------------------------
# Deterministic parameter init (shapes from the PyTorch __init__)
# ----------------------------------------------------------------------------
def init_params(key, in_ch, bbc, split):
    ws = bbc // split
    ks = jax.random.split(key, 15)

    def folded_bn(kg, kb, km, kv, c):
        gamma = 1.0 + 0.1 * jax.random.normal(kg, (c,))
        beta = 0.1 * jax.random.normal(kb, (c,))
        mean = 0.1 * jax.random.normal(km, (c,))
        var = jax.random.uniform(kv, (c,), minval=0.5, maxval=1.5)
        scale = gamma / jnp.sqrt(var + 1e-5)
        bias = beta - mean * scale
        return scale.astype(jnp.float32), bias.astype(jnp.float32)

    p = {}
    # conv1: torch weight (bbc, in_ch, 1, 1) stored as matmul form (in_ch, bbc)
    p["w1"] = (0.1 * jax.random.normal(ks[0], (in_ch, bbc))).astype(jnp.float32)
    p["s1"], p["b1"] = folded_bn(ks[1], ks[2], ks[3], ks[4], bbc)
    # shared 3x3 conv: torch weight (ws, ws, 3, 3) stored as HWIO (3, 3, ws, ws)
    p["w2"] = (0.1 * jax.random.normal(ks[5], (3, 3, ws, ws))).astype(jnp.float32)
    p["s2"], p["b2"] = folded_bn(ks[6], ks[7], ks[8], ks[9], ws)
    # conv3: torch weight (4*bbc, bbc, 1, 1) stored as (bbc, 4*bbc)
    p["w3"] = (0.1 * jax.random.normal(ks[10], (bbc, 4 * bbc))).astype(jnp.float32)
    p["s3"], p["b3"] = folded_bn(ks[11], ks[12], ks[13], ks[14], 4 * bbc)
    return p


if __name__ == "__main__":
    key = jax.random.PRNGKey(0)
    kx, kp = jax.random.split(key)

    N, Cin, H, W = 2, 16, 8, 8
    bbc, split, stride = 16, 4, 1

    x = jax.random.normal(kx, (N, Cin, H, W), dtype=jnp.float32)
    params = init_params(kp, Cin, bbc, split)

    out = bottleneck_forward(x, params, split=split, stride=stride)
    out = jax.block_until_ready(out)

    assert out.shape == (N, 4 * bbc, H, W), out.shape
    ref = reference_forward(x, params, split=split, stride=stride)
    np.testing.assert_allclose(np.asarray(out), np.asarray(ref),
                               rtol=1e-4, atol=1e-4)
    print("KERNEL_OK")
</pallas_src>

<mosaic_0001>
module attributes {stable_mosaic.version = 11 : i64} {
  func.func @_bottleneck_kernel(%arg0: i32, %arg1: memref<64x16xf32, #tpu.memory_space<vmem>>, %arg2: memref<16x16xf32, #tpu.memory_space<vmem>>, %arg3: memref<1x16xf32, #tpu.memory_space<vmem>>, %arg4: memref<1x16xf32, #tpu.memory_space<vmem>>, %arg5: memref<36x4xf32, #tpu.memory_space<vmem>>, %arg6: memref<1x4xf32, #tpu.memory_space<vmem>>, %arg7: memref<1x4xf32, #tpu.memory_space<vmem>>, %arg8: memref<16x64xf32, #tpu.memory_space<vmem>>, %arg9: memref<1x64xf32, #tpu.memory_space<vmem>>, %arg10: memref<1x64xf32, #tpu.memory_space<vmem>>, %arg11: memref<64x64xf32, #tpu.memory_space<vmem>>, %arg12: memref<10x10x4xf32, #tpu.memory_space<vmem>>) attributes {dimension_semantics = [#tpu.dimension_semantics<parallel>], iteration_bounds = array<i64: 2>, scalar_prefetch = 0 : i64, scratch_operands = 1 : i64, tpu.core_type = #tpu.core_type<tc>, window_params = [{transform_indices = @transform_0, window_bounds = array<i64: 64, 16>}, {pipeline_mode = #tpu.pipeline_mode<synchronous>, transform_indices = @transform_1, window_bounds = array<i64: 16, 16>}, {pipeline_mode = #tpu.pipeline_mode<synchronous>, transform_indices = @transform_2, window_bounds = array<i64: 1, 16>}, {pipeline_mode = #tpu.pipeline_mode<synchronous>, transform_indices = @transform_3, window_bounds = array<i64: 1, 16>}, {pipeline_mode = #tpu.pipeline_mode<synchronous>, transform_indices = @transform_4, window_bounds = array<i64: 36, 4>}, {pipeline_mode = #tpu.pipeline_mode<synchronous>, transform_indices = @transform_5, window_bounds = array<i64: 1, 4>}, {pipeline_mode = #tpu.pipeline_mode<synchronous>, transform_indices = @transform_6, window_bounds = array<i64: 1, 4>}, {pipeline_mode = #tpu.pipeline_mode<synchronous>, transform_indices = @transform_7, window_bounds = array<i64: 16, 64>}, {pipeline_mode = #tpu.pipeline_mode<synchronous>, transform_indices = @transform_8, window_bounds = array<i64: 1, 64>}, {pipeline_mode = #tpu.pipeline_mode<synchronous>, transform_indices = @transform_9, window_bounds = array<i64: 1, 64>}, {transform_indices = @transform_10, window_bounds = array<i64: 64, 64>}]} {
    %cst = arith.constant 0.000000e+00 : f32
    %0 = vector.broadcast %cst : f32 to vector<10x10x4xf32>
    %c0 = arith.constant 0 : index
    %c0_0 = arith.constant 0 : index
    %c0_1 = arith.constant 0 : index
    %1 = vector.load %arg12[%c0, %c0_0, %c0_1] : memref<10x10x4xf32, #tpu.memory_space<vmem>>, vector<10x10x4xf32>
    tpu.vector_store %arg12[%c0, %c0_0, %c0_1], %0 {strides = array<i32>} : memref<10x10x4xf32, #tpu.memory_space<vmem>>, vector<10x10x4xf32>,
    %c0_2 = arith.constant 0 : index
    %c0_3 = arith.constant 0 : index
    %2 = vector.load %arg1[%c0_2, %c0_3] : memref<64x16xf32, #tpu.memory_space<vmem>>, vector<64x16xf32>
    %c0_4 = arith.constant 0 : index
    %c0_5 = arith.constant 0 : index
    %3 = vector.load %arg2[%c0_4, %c0_5] : memref<16x16xf32, #tpu.memory_space<vmem>>, vector<16x16xf32>
    %cst_6 = arith.constant dense<0.000000e+00> : vector<64x16xf32>
    %4 = tpu.matmul %2, %3, %cst_6 {dimension_numbers = #tpu.dot_dimension_numbers<[1], [0], [0], [1], [0, 0, 1, 1], [], []>} : vector<64x16xf32>, vector<16x16xf32>, vector<64x16xf32> -> vector<64x16xf32>
    %c0_7 = arith.constant 0 : index
    %c0_8 = arith.constant 0 : index
    %5 = vector.load %arg3[%c0_7, %c0_8] : memref<1x16xf32, #tpu.memory_space<vmem>>, vector<1x16xf32>
    %6 = vector.broadcast %5 : vector<1x16xf32> to vector<64x16xf32>
    %7 = arith.mulf %4, %6 : vector<64x16xf32>
    %c0_9 = arith.constant 0 : index
    %c0_10 = arith.constant 0 : index
    %8 = vector.load %arg4[%c0_9, %c0_10] : memref<1x16xf32, #tpu.memory_space<vmem>>, vector<1x16xf32>
    %9 = vector.broadcast %8 : vector<1x16xf32> to vector<64x16xf32>
    %10 = arith.addf %7, %9 : vector<64x16xf32>
    %cst_11 = arith.constant 0.000000e+00 : f32
    %11 = vector.broadcast %cst_11 : f32 to vector<64x16xf32>
    %12 = arith.maximumf %10, %11 : vector<64x16xf32>
    %c0_12 = arith.constant 0 : index
    %c0_13 = arith.constant 0 : index
    %13 = vector.load %arg6[%c0_12, %c0_13] : memref<1x4xf32, #tpu.memory_space<vmem>>, vector<1x4xf32>
    %c0_14 = arith.constant 0 : index
    %c0_15 = arith.constant 0 : index
    %14 = vector.load %arg7[%c0_14, %c0_15] : memref<1x4xf32, #tpu.memory_space<vmem>>, vector<1x4xf32>
    %c0_16 = arith.constant 0 : index
    %c0_17 = arith.constant 0 : index
    %15 = vector.load %arg5[%c0_16, %c0_17] : memref<36x4xf32, #tpu.memory_space<vmem>>, vector<36x4xf32>
    %16 = vector.extract_strided_slice %12 {offsets = [0, 0], sizes = [64, 4], strides = [1, 1]} : vector<64x16xf32> to vector<64x4xf32>
    %17 = vector.extract_strided_slice %12 {offsets = [0, 4], sizes = [64, 4], strides = [1, 1]} : vector<64x16xf32> to vector<64x4xf32>
    %18 = vector.shape_cast %17 : vector<64x4xf32> to vector<8x8x4xf32>
    %c1 = arith.constant 1 : index
    %c1_18 = arith.constant 1 : index
    %c0_19 = arith.constant 0 : index
    %19 = vector.load %arg12[%c1, %c1_18, %c0_19] : memref<10x10x4xf32, #tpu.memory_space<vmem>>, vector<8x8x4xf32>
    tpu.vector_store %arg12[%c1, %c1_18, %c0_19], %18 {strides = array<i32>} : memref<10x10x4xf32, #tpu.memory_space<vmem>>, vector<8x8x4xf32>,
    %c0_20 = arith.constant 0 : index
    %c0_21 = arith.constant 0 : index
    %c0_22 = arith.constant 0 : index
    %20 = vector.load %arg12[%c0_20, %c0_21, %c0_22] : memref<10x10x4xf32, #tpu.memory_space<vmem>>, vector<8x8x4xf32>
    %21 = vector.shape_cast %20 : vector<8x8x4xf32> to vector<64x4xf32>
    %c0_23 = arith.constant 0 : index
    %c1_24 = arith.constant 1 : index
    %c0_25 = arith.constant 0 : index
    %22 = vector.load %arg12[%c0_23, %c1_24, %c0_25] : memref<10x10x4xf32, #tpu.memory_space<vmem>>, vector<8x8x4xf32>
    %23 = vector.shape_cast %22 : vector<8x8x4xf32> to vector<64x4xf32>
    %c0_26 = arith.constant 0 : index
    %c2 = arith.constant 2 : index
    %c0_27 = arith.constant 0 : index
    %24 = vector.load %arg12[%c0_26, %c2, %c0_27] : memref<10x10x4xf32, #tpu.memory_space<vmem>>, vector<8x8x4xf32>
    %25 = vector.shape_cast %24 : vector<8x8x4xf32> to vector<64x4xf32>
    %c1_28 = arith.constant 1 : index
    %c0_29 = arith.constant 0 : index
    %c0_30 = arith.constant 0 : index
    %26 = vector.load %arg12[%c1_28, %c0_29, %c0_30] : memref<10x10x4xf32, #tpu.memory_space<vmem>>, vector<8x8x4xf32>
    %27 = vector.shape_cast %26 : vector<8x8x4xf32> to vector<64x4xf32>
    %c1_31 = arith.constant 1 : index
    %c1_32 = arith.constant 1 : index
    %c0_33 = arith.constant 0 : index
    %28 = vector.load %arg12[%c1_31, %c1_32, %c0_33] : memref<10x10x4xf32, #tpu.memory_space<vmem>>, vector<8x8x4xf32>
    %29 = vector.shape_cast %28 : vector<8x8x4xf32> to vector<64x4xf32>
    %c1_34 = arith.constant 1 : index
    %c2_35 = arith.constant 2 : index
    %c0_36 = arith.constant 0 : index
    %30 = vector.load %arg12[%c1_34, %c2_35, %c0_36] : memref<10x10x4xf32, #tpu.memory_space<vmem>>, vector<8x8x4xf32>
    %31 = vector.shape_cast %30 : vector<8x8x4xf32> to vector<64x4xf32>
    %c2_37 = arith.constant 2 : index
    %c0_38 = arith.constant 0 : index
    %c0_39 = arith.constant 0 : index
    %32 = vector.load %arg12[%c2_37, %c0_38, %c0_39] : memref<10x10x4xf32, #tpu.memory_space<vmem>>, vector<8x8x4xf32>
    %33 = vector.shape_cast %32 : vector<8x8x4xf32> to vector<64x4xf32>
    %c2_40 = arith.constant 2 : index
    %c1_41 = arith.constant 1 : index
    %c0_42 = arith.constant 0 : index
    %34 = vector.load %arg12[%c2_40, %c1_41, %c0_42] : memref<10x10x4xf32, #tpu.memory_space<vmem>>, vector<8x8x4xf32>
    %35 = vector.shape_cast %34 : vector<8x8x4xf32> to vector<64x4xf32>
    %c2_43 = arith.constant 2 : index
    %c2_44 = arith.constant 2 : index
    %c0_45 = arith.constant 0 : index
    %36 = vector.load %arg12[%c2_43, %c2_44, %c0_45] : memref<10x10x4xf32, #tpu.memory_space<vmem>>, vector<8x8x4xf32>
    %37 = vector.shape_cast %36 : vector<8x8x4xf32> to vector<64x4xf32>
    %38 = tpu.concatenate %21, %23, %25, %27, %29, %31, %33, %35, %37 in 1 : vector<64x4xf32>, vector<64x4xf32>, vector<64x4xf32>, vector<64x4xf32>, vector<64x4xf32>, vector<64x4xf32>, vector<64x4xf32>, vector<64x4xf32>, vector<64x4xf32> -> vector<64x36xf32>
    %cst_46 = arith.constant dense<0.000000e+00> : vector<64x4xf32>
    %39 = tpu.matmul %38, %15, %cst_46 {dimension_numbers = #tpu.dot_dimension_numbers<[1], [0], [0], [1], [0, 0, 1, 1], [], []>} : vector<64x36xf32>, vector<36x4xf32>, vector<64x4xf32> -> vector<64x4xf32>
    %40 = vector.broadcast %13 : vector<1x4xf32> to vector<64x4xf32>
    %41 = arith.mulf %39, %40 : vector<64x4xf32>
    %42 = vector.broadcast %14 : vector<1x4xf32> to vector<64x4xf32>
    %43 = arith.addf %41, %42 : vector<64x4xf32>
    %cst_47 = arith.constant 0.000000e+00 : f32
    %44 = vector.broadcast %cst_47 : f32 to vector<64x4xf32>
    %45 = arith.maximumf %43, %44 : vector<64x4xf32>
    %46 = vector.extract_strided_slice %12 {offsets = [0, 8], sizes = [64, 4], strides = [1, 1]} : vector<64x16xf32> to vector<64x4xf32>
    %47 = arith.addf %45, %46 : vector<64x4xf32>
    %48 = vector.shape_cast %47 : vector<64x4xf32> to vector<8x8x4xf32>
    %c1_48 = arith.constant 1 : index
    %c1_49 = arith.constant 1 : index
    %c0_50 = arith.constant 0 : index
    %49 = vector.load %arg12[%c1_48, %c1_49, %c0_50] : memref<10x10x4xf32, #tpu.memory_space<vmem>>, vector<8x8x4xf32>
    tpu.vector_store %arg12[%c1_48, %c1_49, %c0_50], %48 {strides = array<i32>} : memref<10x10x4xf32, #tpu.memory_space<vmem>>, vector<8x8x4xf32>,
    %c0_51 = arith.constant 0 : index
    %c0_52 = arith.constant 0 : index
    %c0_53 = arith.constant 0 : index
    %50 = vector.load %arg12[%c0_51, %c0_52, %c0_53] : memref<10x10x4xf32, #tpu.memory_space<vmem>>, vector<8x8x4xf32>
    %51 = vector.shape_cast %50 : vector<8x8x4xf32> to vector<64x4xf32>
    %c0_54 = arith.constant 0 : index
    %c1_55 = arith.constant 1 : index
    %c0_56 = arith.constant 0 : index
    %52 = vector.load %arg12[%c0_54, %c1_55, %c0_56] : memref<10x10x4xf32, #tpu.memory_space<vmem>>, vector<8x8x4xf32>
    %53 = vector.shape_cast %52 : vector<8x8x4xf32> to vector<64x4xf32>
    %c0_57 = arith.constant 0 : index
    %c2_58 = arith.constant 2 : index
    %c0_59 = arith.constant 0 : index
    %54 = vector.load %arg12[%c0_57, %c2_58, %c0_59] : memref<10x10x4xf32, #tpu.memory_space<vmem>>, vector<8x8x4xf32>
    %55 = vector.shape_cast %54 : vector<8x8x4xf32> to vector<64x4xf32>
    %c1_60 = arith.constant 1 : index
    %c0_61 = arith.constant 0 : index
    %c0_62 = arith.constant 0 : index
    %56 = vector.load %arg12[%c1_60, %c0_61, %c0_62] : memref<10x10x4xf32, #tpu.memory_space<vmem>>, vector<8x8x4xf32>
    %57 = vector.shape_cast %56 : vector<8x8x4xf32> to vector<64x4xf32>
    %c1_63 = arith.constant 1 : index
    %c1_64 = arith.constant 1 : index
    %c0_65 = arith.constant 0 : index
    %58 = vector.load %arg12[%c1_63, %c1_64, %c0_65] : memref<10x10x4xf32, #tpu.memory_space<vmem>>, vector<8x8x4xf32>
    %59 = vector.shape_cast %58 : vector<8x8x4xf32> to vector<64x4xf32>
    %c1_66 = arith.constant 1 : index
    %c2_67 = arith.constant 2 : index
    %c0_68 = arith.constant 0 : index
    %60 = vector.load %arg12[%c1_66, %c2_67, %c0_68] : memref<10x10x4xf32, #tpu.memory_space<vmem>>, vector<8x8x4xf32>
    %61 = vector.shape_cast %60 : vector<8x8x4xf32> to vector<64x4xf32>
    %c2_69 = arith.constant 2 : index
    %c0_70 = arith.constant 0 : index
    %c0_71 = arith.constant 0 : index
    %62 = vector.load %arg12[%c2_69, %c0_70, %c0_71] : memref<10x10x4xf32, #tpu.memory_space<vmem>>, vector<8x8x4xf32>
    %63 = vector.shape_cast %62 : vector<8x8x4xf32> to vector<64x4xf32>
    %c2_72 = arith.constant 2 : index
    %c1_73 = arith.constant 1 : index
    %c0_74 = arith.constant 0 : index
    %64 = vector.load %arg12[%c2_72, %c1_73, %c0_74] : memref<10x10x4xf32, #tpu.memory_space<vmem>>, vector<8x8x4xf32>
    %65 = vector.shape_cast %64 : vector<8x8x4xf32> to vector<64x4xf32>
    %c2_75 = arith.constant 2 : index
    %c2_76 = arith.constant 2 : index
    %c0_77 = arith.constant 0 : index
    %66 = vector.load %arg12[%c2_75, %c2_76, %c0_77] : memref<10x10x4xf32, #tpu.memory_space<vmem>>, vector<8x8x4xf32>
    %67 = vector.shape_cast %66 : vector<8x8x4xf32> to vector<64x4xf32>
    %68 = tpu.concatenate %51, %53, %55, %57, %59, %61, %63, %65, %67 in 1 : vector<64x4xf32>, vector<64x4xf32>, vector<64x4xf32>, vector<64x4xf32>, vector<64x4xf32>, vector<64x4xf32>, vector<64x4xf32>, vector<64x4xf32>, vector<64x4xf32> -> vector<64x36xf32>
    %cst_78 = arith.constant dense<0.000000e+00> : vector<64x4xf32>
    %69 = tpu.matmul %68, %15, %cst_78 {dimension_numbers = #tpu.dot_dimension_numbers<[1], [0], [0], [1], [0, 0, 1, 1], [], []>} : vector<64x36xf32>, vector<36x4xf32>, vector<64x4xf32> -> vector<64x4xf32>
    %70 = vector.broadcast %13 : vector<1x4xf32> to vector<64x4xf32>
    %71 = arith.mulf %69, %70 : vector<64x4xf32>
    %72 = vector.broadcast %14 : vector<1x4xf32> to vector<64x4xf32>
    %73 = arith.addf %71, %72 : vector<64x4xf32>
    %cst_79 = arith.constant 0.000000e+00 : f32
    %74 = vector.broadcast %cst_79 : f32 to vector<64x4xf32>
    %75 = arith.maximumf %73, %74 : vector<64x4xf32>
    %76 = vector.extract_strided_slice %12 {offsets = [0, 12], sizes = [64, 4], strides = [1, 1]} : vector<64x16xf32> to vector<64x4xf32>
    %77 = arith.addf %75, %76 : vector<64x4xf32>
    %78 = vector.shape_cast %77 : vector<64x4xf32> to vector<8x8x4xf32>
    %c1_80 = arith.constant 1 : index
    %c1_81 = arith.constant 1 : index
    %c0_82 = arith.constant 0 : index
    %79 = vector.load %arg12[%c1_80, %c1_81, %c0_82] : memref<10x10x4xf32, #tpu.memory_space<vmem>>, vector<8x8x4xf32>
    tpu.vector_store %arg12[%c1_80, %c1_81, %c0_82], %78 {strides = array<i32>} : memref<10x10x4xf32, #tpu.memory_space<vmem>>, vector<8x8x4xf32>,
    %c0_83 = arith.constant 0 : index
    %c0_84 = arith.constant 0 : index
    %c0_85 = arith.constant 0 : index
    %80 = vector.load %arg12[%c0_83, %c0_84, %c0_85] : memref<10x10x4xf32, #tpu.memory_space<vmem>>, vector<8x8x4xf32>
    %81 = vector.shape_cast %80 : vector<8x8x4xf32> to vector<64x4xf32>
    %c0_86 = arith.constant 0 : index
    %c1_87 = arith.constant 1 : index
    %c0_88 = arith.constant 0 : index
    %82 = vector.load %arg12[%c0_86, %c1_87, %c0_88] : memref<10x10x4xf32, #tpu.memory_space<vmem>>, vector<8x8x4xf32>
    %83 = vector.shape_cast %82 : vector<8x8x4xf32> to vector<64x4xf32>
    %c0_89 = arith.constant 0 : index
    %c2_90 = arith.constant 2 : index
    %c0_91 = arith.constant 0 : index
    %84 = vector.load %arg12[%c0_89, %c2_90, %c0_91] : memref<10x10x4xf32, #tpu.memory_space<vmem>>, vector<8x8x4xf32>
    %85 = vector.shape_cast %84 : vector<8x8x4xf32> to vector<64x4xf32>
    %c1_92 = arith.constant 1 : index
    %c0_93 = arith.constant 0 : index
    %c0_94 = arith.constant 0 : index
    %86 = vector.load %arg12[%c1_92, %c0_93, %c0_94] : memref<10x10x4xf32, #tpu.memory_space<vmem>>, vector<8x8x4xf32>
    %87 = vector.shape_cast %86 : vector<8x8x4xf32> to vector<64x4xf32>
    %c1_95 = arith.constant 1 : index
    %c1_96 = arith.constant 1 : index
    %c0_97 = arith.constant 0 : index
    %88 = vector.load %arg12[%c1_95, %c1_96, %c0_97] : memref<10x10x4xf32, #tpu.memory_space<vmem>>, vector<8x8x4xf32>
    %89 = vector.shape_cast %88 : vector<8x8x4xf32> to vector<64x4xf32>
    %c1_98 = arith.constant 1 : index
    %c2_99 = arith.constant 2 : index
    %c0_100 = arith.constant 0 : index
    %90 = vector.load %arg12[%c1_98, %c2_99, %c0_100] : memref<10x10x4xf32, #tpu.memory_space<vmem>>, vector<8x8x4xf32>
    %91 = vector.shape_cast %90 : vector<8x8x4xf32> to vector<64x4xf32>
    %c2_101 = arith.constant 2 : index
    %c0_102 = arith.constant 0 : index
    %c0_103 = arith.constant 0 : index
    %92 = vector.load %arg12[%c2_101, %c0_102, %c0_103] : memref<10x10x4xf32, #tpu.memory_space<vmem>>, vector<8x8x4xf32>
    %93 = vector.shape_cast %92 : vector<8x8x4xf32> to vector<64x4xf32>
    %c2_104 = arith.constant 2 : index
    %c1_105 = arith.constant 1 : index
    %c0_106 = arith.constant 0 : index
    %94 = vector.load %arg12[%c2_104, %c1_105, %c0_106] : memref<10x10x4xf32, #tpu.memory_space<vmem>>, vector<8x8x4xf32>
    %95 = vector.shape_cast %94 : vector<8x8x4xf32> to vector<64x4xf32>
    %c2_107 = arith.constant 2 : index
    %c2_108 = arith.constant 2 : index
    %c0_109 = arith.constant 0 : index
    %96 = vector.load %arg12[%c2_107, %c2_108, %c0_109] : memref<10x10x4xf32, #tpu.memory_space<vmem>>, vector<8x8x4xf32>
    %97 = vector.shape_cast %96 : vector<8x8x4xf32> to vector<64x4xf32>
    %98 = tpu.concatenate %81, %83, %85, %87, %89, %91, %93, %95, %97 in 1 : vector<64x4xf32>, vector<64x4xf32>, vector<64x4xf32>, vector<64x4xf32>, vector<64x4xf32>, vector<64x4xf32>, vector<64x4xf32>, vector<64x4xf32>, vector<64x4xf32> -> vector<64x36xf32>
    %cst_110 = arith.constant dense<0.000000e+00> : vector<64x4xf32>
    %99 = tpu.matmul %98, %15, %cst_110 {dimension_numbers = #tpu.dot_dimension_numbers<[1], [0], [0], [1], [0, 0, 1, 1], [], []>} : vector<64x36xf32>, vector<36x4xf32>, vector<64x4xf32> -> vector<64x4xf32>
    %100 = vector.broadcast %13 : vector<1x4xf32> to vector<64x4xf32>
    %101 = arith.mulf %99, %100 : vector<64x4xf32>
    %102 = vector.broadcast %14 : vector<1x4xf32> to vector<64x4xf32>
    %103 = arith.addf %101, %102 : vector<64x4xf32>
    %cst_111 = arith.constant 0.000000e+00 : f32
    %104 = vector.broadcast %cst_111 : f32 to vector<64x4xf32>
    %105 = arith.maximumf %103, %104 : vector<64x4xf32>
    %106 = tpu.concatenate %16, %45, %75, %105 in 1 : vector<64x4xf32>, vector<64x4xf32>, vector<64x4xf32>, vector<64x4xf32> -> vector<64x16xf32>
    %c0_112 = arith.constant 0 : index
    %c0_113 = arith.constant 0 : index
    %107 = vector.load %arg8[%c0_112, %c0_113] : memref<16x64xf32, #tpu.memory_space<vmem>>, vector<16x64xf32>
    %cst_114 = arith.constant dense<0.000000e+00> : vector<64x64xf32>
    %108 = tpu.matmul %106, %107, %cst_114 {dimension_numbers = #tpu.dot_dimension_numbers<[1], [0], [0], [1], [0, 0, 1, 1], [], []>} : vector<64x16xf32>, vector<16x64xf32>, vector<64x64xf32> -> vector<64x64xf32>
    %c0_115 = arith.constant 0 : index
    %c0_116 = arith.constant 0 : index
    %109 = vector.load %arg9[%c0_115, %c0_116] : memref<1x64xf32, #tpu.memory_space<vmem>>, vector<1x64xf32>
    %110 = vector.broadcast %109 : vector<1x64xf32> to vector<64x64xf32>
    %111 = arith.mulf %108, %110 : vector<64x64xf32>
    %c0_117 = arith.constant 0 : index
    %c0_118 = arith.constant 0 : index
    %112 = vector.load %arg10[%c0_117, %c0_118] : memref<1x64xf32, #tpu.memory_space<vmem>>, vector<1x64xf32>
    %113 = vector.broadcast %112 : vector<1x64xf32> to vector<64x64xf32>
    %114 = arith.addf %111, %113 : vector<64x64xf32>
    %c0_119 = arith.constant 0 : index
    %c0_120 = arith.constant 0 : index
    %115 = vector.load %arg11[%c0_119, %c0_120] : memref<64x64xf32, #tpu.memory_space<vmem>>, vector<64x64xf32>
    tpu.vector_store %arg11[%c0_119, %c0_120], %114 {strides = array<i32>} : memref<64x64xf32, #tpu.memory_space<vmem>>, vector<64x64xf32>,
    return
  }
  func.func @transform_0(%arg0: i32) -> (i32, i32) {
    %c0_i32 = arith.constant 0 : i32
    %c0_i32_0 = arith.constant 0 : i32
    return %arg0, %c0_i32 : i32, i32
  }
  func.func @transform_1(%arg0: i32) -> (i32, i32) {
    %c0_i32 = arith.constant 0 : i32
    %c0_i32_0 = arith.constant 0 : i32
    %c0_i32_1 = arith.constant 0 : i32
    return %c0_i32, %c0_i32_0 : i32, i32
  }
  func.func @transform_2(%arg0: i32) -> (i32, i32) {
    %c0_i32 = arith.constant 0 : i32
    %c0_i32_0 = arith.constant 0 : i32
    %c0_i32_1 = arith.constant 0 : i32
    return %c0_i32, %c0_i32_0 : i32, i32
  }
  func.func @transform_3(%arg0: i32) -> (i32, i32) {
    %c0_i32 = arith.constant 0 : i32
    %c0_i32_0 = arith.constant 0 : i32
    %c0_i32_1 = arith.constant 0 : i32
    return %c0_i32, %c0_i32_0 : i32, i32
  }
  func.func @transform_4(%arg0: i32) -> (i32, i32) {
    %c0_i32 = arith.constant 0 : i32
    %c0_i32_0 = arith.constant 0 : i32
    %c0_i32_1 = arith.constant 0 : i32
    return %c0_i32, %c0_i32_0 : i32, i32
  }
  func.func @transform_5(%arg0: i32) -> (i32, i32) {
    %c0_i32 = arith.constant 0 : i32
    %c0_i32_0 = arith.constant 0 : i32
    %c0_i32_1 = arith.constant 0 : i32
    return %c0_i32, %c0_i32_0 : i32, i32
  }
  func.func @transform_6(%arg0: i32) -> (i32, i32) {
    %c0_i32 = arith.constant 0 : i32
    %c0_i32_0 = arith.constant 0 : i32
    %c0_i32_1 = arith.constant 0 : i32
    return %c0_i32, %c0_i32_0 : i32, i32
  }
  func.func @transform_7(%arg0: i32) -> (i32, i32) {
    %c0_i32 = arith.constant 0 : i32
    %c0_i32_0 = arith.constant 0 : i32
    %c0_i32_1 = arith.constant 0 : i32
    return %c0_i32, %c0_i32_0 : i32, i32
  }
  func.func @transform_8(%arg0: i32) -> (i32, i32) {
    %c0_i32 = arith.constant 0 : i32
    %c0_i32_0 = arith.constant 0 : i32
    %c0_i32_1 = arith.constant 0 : i32
    return %c0_i32, %c0_i32_0 : i32, i32
  }
  func.func @transform_9(%arg0: i32) -> (i32, i32) {
    %c0_i32 = arith.constant 0 : i32
    %c0_i32_0 = arith.constant 0 : i32
    %c0_i32_1 = arith.constant 0 : i32
    return %c0_i32, %c0_i32_0 : i32, i32
  }
  func.func @transform_10(%arg0: i32) -> (i32, i32) {
    %c0_i32 = arith.constant 0 : i32
    %c0_i32_0 = arith.constant 0 : i32
    return %arg0, %c0_i32 : i32, i32
  }
}

</mosaic_0001>

<llo_original>
// kernel: tpu_custom_call.1
$region0: #{tpu_custom_call.1}
  #allocation0 [shape = 'u32[]', space=smem, size = 0x4, offset = 0x4, fixed_abs, tag = 'smem constant byte address 0x4 - core index']
  #allocation1 [shape = 'u32[72,128]{1,0:T(1,128)}', space=vmem, size = 0x9000, scoped, tag = 'internal scratch']
  #allocation2 [shape = 'f32[10,10,4]{2,1,0:T(8,128)}', space=vmem, size = 0x14000, scoped, tag = 'scratch operand']
  %s0 = inlined_call_operand.vmem [shape: f32[128,16], index: 0, kind: input, shape index: {}]
  %s1 = inlined_call_operand.vmem [shape: f32[16,16], index: 1, kind: input, shape index: {}]
  %s2 = inlined_call_operand.vmem [shape: f32[1,16], index: 2, kind: input, shape index: {}]
  %s3 = inlined_call_operand.vmem [shape: f32[1,16], index: 3, kind: input, shape index: {}]
  %s4 = inlined_call_operand.vmem [shape: f32[36,4], index: 4, kind: input, shape index: {}]
  %s5 = inlined_call_operand.vmem [shape: f32[1,4], index: 5, kind: input, shape index: {}]
  %s6 = inlined_call_operand.vmem [shape: f32[1,4], index: 6, kind: input, shape index: {}]
  %s7 = inlined_call_operand.vmem [shape: f32[16,64], index: 7, kind: input, shape index: {}]
  %s8 = inlined_call_operand.vmem [shape: f32[1,64], index: 8, kind: input, shape index: {}]
  %s9 = inlined_call_operand.vmem [shape: f32[1,64], index: 9, kind: input, shape index: {}]
  %s10 = inlined_call_operand.vmem [shape: f32[128,64], index: 10, kind: output, shape index: {}]
  %s11 = sld [smem:[#allocation0]]
  $region73: #{tpu_custom_call.1} parent=0
    _
  %s13 = ssub.s32 1, %s11
  %s14 = scalar_select 0, %s13, %s11
  loop: start=0, step=1, limit=4
  $region2: #{tpu_custom_call.1} parent=0 // loop_pre_header
    _
  $region3: #{tpu_custom_call.1} parent=0 // loop_header
    %s16 = sphi 0, %s20
    %p17 = scmp.ge.s32.totalorder %s16, 4
    %s26 = sphi 0, %s28
    %s29 = sphi 0, %s26
    %s30 = sphi 0, %s29
    %s46 = sphi 0, %s30
    %s50 = sphi 0, %s50
    %s52 = sphi 0, %s50
    %s53 = sphi 0, %s52
    %s67 = sphi 0, %s53
    %s71 = sphi 0, %s71
    %s73 = sphi 0, %s71
    %s74 = sphi 0, %s73
    %s88 = sphi 0, %s74
    %s92 = sphi 0, %s92
    %s94 = sphi 0, %s92
    %s95 = sphi 0, %s94
    %s109 = sphi 0, %s95
    %s113 = sphi 0, %s113
    %s115 = sphi 0, %s113
    %s116 = sphi 0, %s115
    %s130 = sphi 0, %s116
    %s134 = sphi 0, %s134
    %s136 = sphi 0, %s134
    %s137 = sphi 0, %s136
    %s151 = sphi 0, %s137
    %s155 = sphi 0, %s155
    %s157 = sphi 0, %s155
    %s158 = sphi 0, %s157
    %s172 = sphi 0, %s158
    %s176 = sphi 0, %s176
    %s178 = sphi 0, %s176
    %s179 = sphi 0, %s178
    %s193 = sphi 0, %s179
    %s197 = sphi 0, %s197
    %s199 = sphi 0, %s197
    %s200 = sphi 0, %s199
    %s214 = sphi 0, %s200
    %s218 = sphi 0, %s218
    %s220 = sphi 0, %s218
    %s221 = sphi 0, %s220
    %s235 = sphi 0, %s221
    %s241 = sphi 0, %s243
    %s244 = sphi 0, %s241
    %s245 = sphi 0, %s244
    %s261 = sphi 0, %s245
  $region4: #{tpu_custom_call.1} parent=0 // loop_header_branch
    %19 = sbr.rel (%p17) target = $region8
  $region5: #{tpu_custom_call.1} parent=0 // loop_body
    %s21 = ssub.s32 %s16, 1
    %s22 = ssub.s32 %s16, 2
    %s23 = sadd.s32 %s16, 1
    %s24 = ssub.s32 %s16, %s23
    %p25 = scmp.eq.s32.totalorder %s24, 0
    %s27 = sadd.s32 %s26, 1
    %s28 = scalar_select %p25, %s26, %s27
    %p31 = pneg %p25
    %p32 = scmp.eq.s32.totalorder %s16, 1
    %p33 = por %p31, %p32
    %p34 = scmp.ne.s32.totalorder %s26, %s29
    %p35 = scmp.eq.s32.totalorder %s16, 0
    %p36 = por %p34, %p35
    %p37 = scmp.ne.s32.totalorder %s26, %s29
    %p38 = scmp.eq.s32.totalorder %s21, 1
    %p39 = por %p37, %p38
    %p40 = scmp.ne.s32.totalorder %s29, %s30
    %p41 = scmp.eq.s32.totalorder %s21, 0
    %p42 = por %p40, %p41
    %p43 = scmp.ne.s32.totalorder %s29, %s30
    %p44 = scmp.eq.s32.totalorder %s22, 1
    %p45 = por %p43, %p44
    %p47 = scmp.ne.s32.totalorder %s30, %s46
    %p48 = scmp.eq.s32.totalorder %s22, 0
    %p49 = por %p47, %p48
    %s51 = sadd.s32 %s50, 1
    %p54 = scmp.eq.s32.totalorder %s16, 1
    %p55 = scmp.ne.s32.totalorder %s50, %s52
    %p56 = scmp.eq.s32.totalorder %s16, 0
    %p57 = por %p55, %p56
    %p58 = scmp.ne.s32.totalorder %s50, %s52
    %p59 = scmp.eq.s32.totalorder %s21, 1
    %p60 = por %p58, %p59
    %p61 = scmp.ne.s32.totalorder %s52, %s53
    %p62 = scmp.eq.s32.totalorder %s21, 0
    %p63 = por %p61, %p62
    %p64 = scmp.ne.s32.totalorder %s52, %s53
    %p65 = scmp.eq.s32.totalorder %s22, 1
    %p66 = por %p64, %p65
    %p68 = scmp.ne.s32.totalorder %s53, %s67
    %p69 = scmp.eq.s32.totalorder %s22, 0
    %p70 = por %p68, %p69
    %s72 = sadd.s32 %s71, 1
    %p75 = scmp.eq.s32.totalorder %s16, 1
    %p76 = scmp.ne.s32.totalorder %s71, %s73
    %p77 = scmp.eq.s32.totalorder %s16, 0
    %p78 = por %p76, %p77
    %p79 = scmp.ne.s32.totalorder %s71, %s73
    %p80 = scmp.eq.s32.totalorder %s21, 1
    %p81 = por %p79, %p80
    %p82 = scmp.ne.s32.totalorder %s73, %s74
    %p83 = scmp.eq.s32.totalorder %s21, 0
    %p84 = por %p82, %p83
    %p85 = scmp.ne.s32.totalorder %s73, %s74
    %p86 = scmp.eq.s32.totalorder %s22, 1
    %p87 = por %p85, %p86
    %p89 = scmp.ne.s32.totalorder %s74, %s88
    %p90 = scmp.eq.s32.totalorder %s22, 0
    %p91 = por %p89, %p90
    %s93 = sadd.s32 %s92, 1
    %p96 = scmp.eq.s32.totalorder %s16, 1
    %p97 = scmp.ne.s32.totalorder %s92, %s94
    %p98 = scmp.eq.s32.totalorder %s16, 0
    %p99 = por %p97, %p98
    %p100 = scmp.ne.s32.totalorder %s92, %s94
    %p101 = scmp.eq.s32.totalorder %s21, 1
    %p102 = por %p100, %p101
    %p103 = scmp.ne.s32.totalorder %s94, %s95
    %p104 = scmp.eq.s32.totalorder %s21, 0
    %p105 = por %p103, %p104
    %p106 = scmp.ne.s32.totalorder %s94, %s95
    %p107 = scmp.eq.s32.totalorder %s22, 1
    %p108 = por %p106, %p107
    %p110 = scmp.ne.s32.totalorder %s95, %s109
    %p111 = scmp.eq.s32.totalorder %s22, 0
    %p112 = por %p110, %p111
    %s114 = sadd.s32 %s113, 1
    %p117 = scmp.eq.s32.totalorder %s16, 1
    %p118 = scmp.ne.s32.totalorder %s113, %s115
    %p119 = scmp.eq.s32.totalorder %s16, 0
    %p120 = por %p118, %p119
    %p121 = scmp.ne.s32.totalorder %s113, %s115
    %p122 = scmp.eq.s32.totalorder %s21, 1
    %p123 = por %p121, %p122
    %p124 = scmp.ne.s32.totalorder %s115, %s116
    %p125 = scmp.eq.s32.totalorder %s21, 0
    %p126 = por %p124, %p125
    %p127 = scmp.ne.s32.totalorder %s115, %s116
    %p128 = scmp.eq.s32.totalorder %s22, 1
    %p129 = por %p127, %p128
    %p131 = scmp.ne.s32.totalorder %s116, %s130
    %p132 = scmp.eq.s32.totalorder %s22, 0
    %p133 = por %p131, %p132
    %s135 = sadd.s32 %s134, 1
    %p138 = scmp.eq.s32.totalorder %s16, 1
    %p139 = scmp.ne.s32.totalorder %s134, %s136
    %p140 = scmp.eq.s32.totalorder %s16, 0
    %p141 = por %p139, %p140
    %p142 = scmp.ne.s32.totalorder %s134, %s136
    %p143 = scmp.eq.s32.totalorder %s21, 1
    %p144 = por %p142, %p143
    %p145 = scmp.ne.s32.totalorder %s136, %s137
    %p146 = scmp.eq.s32.totalorder %s21, 0
    %p147 = por %p145, %p146
    %p148 = scmp.ne.s32.totalorder %s136, %s137
    %p149 = scmp.eq.s32.totalorder %s22, 1
    %p150 = por %p148, %p149
    %p152 = scmp.ne.s32.totalorder %s137, %s151
    %p153 = scmp.eq.s32.totalorder %s22, 0
    %p154 = por %p152, %p153
    %s156 = sadd.s32 %s155, 1
    %p159 = scmp.eq.s32.totalorder %s16, 1
    %p160 = scmp.ne.s32.totalorder %s155, %s157
    %p161 = scmp.eq.s32.totalorder %s16, 0
    %p162 = por %p160, %p161
    %p163 = scmp.ne.s32.totalorder %s155, %s157
    %p164 = scmp.eq.s32.totalorder %s21, 1
    %p165 = por %p163, %p164
    %p166 = scmp.ne.s32.totalorder %s157, %s158
    %p167 = scmp.eq.s32.totalorder %s21, 0
    %p168 = por %p166, %p167
    %p169 = scmp.ne.s32.totalorder %s157, %s158
    %p170 = scmp.eq.s32.totalorder %s22, 1
    %p171 = por %p169, %p170
    %p173 = scmp.ne.s32.totalorder %s158, %s172
    %p174 = scmp.eq.s32.totalorder %s22, 0
    %p175 = por %p173, %p174
    %s177 = sadd.s32 %s176, 1
    %p180 = scmp.eq.s32.totalorder %s16, 1
    %p181 = scmp.ne.s32.totalorder %s176, %s178
    %p182 = scmp.eq.s32.totalorder %s16, 0
    %p183 = por %p181, %p182
    %p184 = scmp.ne.s32.totalorder %s176, %s178
    %p185 = scmp.eq.s32.totalorder %s21, 1
    %p186 = por %p184, %p185
    %p187 = scmp.ne.s32.totalorder %s178, %s179
    %p188 = scmp.eq.s32.totalorder %s21, 0
    %p189 = por %p187, %p188
    %p190 = scmp.ne.s32.totalorder %s178, %s179
    %p191 = scmp.eq.s32.totalorder %s22, 1
    %p192 = por %p190, %p191
    %p194 = scmp.ne.s32.totalorder %s179, %s193
    %p195 = scmp.eq.s32.totalorder %s22, 0
    %p196 = por %p194, %p195
    %s198 = sadd.s32 %s197, 1
    %p201 = scmp.eq.s32.totalorder %s16, 1
    %p202 = scmp.ne.s32.totalorder %s197, %s199
    %p203 = scmp.eq.s32.totalorder %s16, 0
    %p204 = por %p202, %p203
    %p205 = scmp.ne.s32.totalorder %s197, %s199
    %p206 = scmp.eq.s32.totalorder %s21, 1
    %p207 = por %p205, %p206
    %p208 = scmp.ne.s32.totalorder %s199, %s200
    %p209 = scmp.eq.s32.totalorder %s21, 0
    %p210 = por %p208, %p209
    %p211 = scmp.ne.s32.totalorder %s199, %s200
    %p212 = scmp.eq.s32.totalorder %s22, 1
    %p213 = por %p211, %p212
    %p215 = scmp.ne.s32.totalorder %s200, %s214
    %p216 = scmp.eq.s32.totalorder %s22, 0
    %p217 = por %p215, %p216
    %s219 = sadd.s32 %s218, 1
    %p222 = scmp.eq.s32.totalorder %s16, 1
    %p223 = scmp.ne.s32.totalorder %s218, %s220
    %p224 = scmp.eq.s32.totalorder %s16, 0
    %p225 = por %p223, %p224
    %p226 = scmp.ne.s32.totalorder %s218, %s220
    %p227 = scmp.eq.s32.totalorder %s21, 1
    %p228 = por %p226, %p227
    %p229 = scmp.ne.s32.totalorder %s220, %s221
    %p230 = scmp.eq.s32.totalorder %s21, 0
    %p231 = por %p229, %p230
    %p232 = scmp.ne.s32.totalorder %s220, %s221
    %p233 = scmp.eq.s32.totalorder %s22, 1
    %p234 = por %p232, %p233
    %p236 = scmp.ne.s32.totalorder %s221, %s235
    %p237 = scmp.eq.s32.totalorder %s22, 0
    %p238 = por %p236, %p237
    %s239 = ssub.s32 %s16, %s23
    %p240 = scmp.eq.s32.totalorder %s239, 0
    %s242 = sadd.s32 %s241, 1
    %s243 = scalar_select %p240, %s241, %s242
    %p246 = pneg %p240
    %p247 = scmp.eq.s32.totalorder %s16, 1
    %p248 = por %p246, %p247
    %p249 = scmp.ne.s32.totalorder %s241, %s244
    %p250 = scmp.eq.s32.totalorder %s16, 0
    %p251 = por %p249, %p250
    %p252 = scmp.ne.s32.totalorder %s241, %s244
    %p253 = scmp.eq.s32.totalorder %s21, 1
    %p254 = por %p252, %p253
    %p255 = scmp.ne.s32.totalorder %s244, %s245
    %p256 = scmp.eq.s32.totalorder %s21, 0
    %p257 = por %p255, %p256
    %p258 = scmp.ne.s32.totalorder %s244, %s245
    %p259 = scmp.eq.s32.totalorder %s22, 1
    %p260 = por %p258, %p259
    %p262 = scmp.ne.s32.totalorder %s245, %s261
    %p263 = scmp.eq.s32.totalorder %s22, 0
    %p264 = por %p262, %p263
    %p265 = scmp.le.s32.totalorder 1, %s16
    %p266 = scmp.lt.s32.totalorder %s16, 3
    %p267 = pnand %p265, %p266
    %p268 = pneg %p267
    // Predicated region
    $region9: #{tpu_custom_call.1} parent=5 // pred_check
      _
    $region10: #{tpu_custom_call.1} parent=5 // pred_check_branch
      %270 = sbr.rel (%p267) target = $region12
    $region11: #{tpu_custom_call.1} parent=5 // pred_region
      %s271 = ssub.s32 %s16, 1
      // Predicated region
      $region13: #{tpu_custom_call.1} parent=11 // pred_check
        %p272 = pneg %p63
      $region14: #{tpu_custom_call.1} parent=11 // pred_check_branch
        %274 = sbr.rel (%p272) target = $region16
      $region15: #{tpu_custom_call.1} parent=11 // pred_region
        _
      $region16: #{tpu_custom_call.1} parent=11 // pred_fallthru
        _
      // Predicated region
      $region17: #{tpu_custom_call.1} parent=11 // pred_check
        %p275 = pneg %p84
      $region18: #{tpu_custom_call.1} parent=11 // pred_check_branch
        %277 = sbr.rel (%p275) target = $region20
      $region19: #{tpu_custom_call.1} parent=11 // pred_region
        _
      $region20: #{tpu_custom_call.1} parent=11 // pred_fallthru
        _
      // Predicated region
      $region21: #{tpu_custom_call.1} parent=11 // pred_check
        %p278 = pneg %p105
      $region22: #{tpu_custom_call.1} parent=11 // pred_check_branch
        %280 = sbr.rel (%p278) target = $region24
      $region23: #{tpu_custom_call.1} parent=11 // pred_region
        _
      $region24: #{tpu_custom_call.1} parent=11 // pred_fallthru
        _
      // Predicated region
      $region25: #{tpu_custom_call.1} parent=11 // pred_check
        %p281 = pneg %p126
      $region26: #{tpu_custom_call.1} parent=11 // pred_check_branch
        %283 = sbr.rel (%p281) target = $region28
      $region27: #{tpu_custom_call.1} parent=11 // pred_region
        _
      $region28: #{tpu_custom_call.1} parent=11 // pred_fallthru
        _
      // Predicated region
      $region29: #{tpu_custom_call.1} parent=11 // pred_check
        %p284 = pneg %p147
      $region30: #{tpu_custom_call.1} parent=11 // pred_check_branch
        %286 = sbr.rel (%p284) target = $region32
      $region31: #{tpu_custom_call.1} parent=11 // pred_region
        _
      $region32: #{tpu_custom_call.1} parent=11 // pred_fallthru
        _
      // Predicated region
      $region33: #{tpu_custom_call.1} parent=11 // pred_check
        %p287 = pneg %p168
      $region34: #{tpu_custom_call.1} parent=11 // pred_check_branch
        %289 = sbr.rel (%p287) target = $region36
      $region35: #{tpu_custom_call.1} parent=11 // pred_region
        _
      $region36: #{tpu_custom_call.1} parent=11 // pred_fallthru
        _
      // Predicated region
      $region37: #{tpu_custom_call.1} parent=11 // pred_check
        %p290 = pneg %p189
      $region38: #{tpu_custom_call.1} parent=11 // pred_check_branch
        %292 = sbr.rel (%p290) target = $region40
      $region39: #{tpu_custom_call.1} parent=11 // pred_region
        _
      $region40: #{tpu_custom_call.1} parent=11 // pred_fallthru
        _
      // Predicated region
      $region41: #{tpu_custom_call.1} parent=11 // pred_check
        %p293 = pneg %p210
      $region42: #{tpu_custom_call.1} parent=11 // pred_check_branch
        %295 = sbr.rel (%p293) target = $region44
      $region43: #{tpu_custom_call.1} parent=11 // pred_region
        _
      $region44: #{tpu_custom_call.1} parent=11 // pred_fallthru
        _
      // Predicated region
      $region45: #{tpu_custom_call.1} parent=11 // pred_check
        %p296 = pneg %p231
      $region46: #{tpu_custom_call.1} parent=11 // pred_check_branch
        %298 = sbr.rel (%p296) target = $region48
      $region47: #{tpu_custom_call.1} parent=11 // pred_region
        _
      $region48: #{tpu_custom_call.1} parent=11 // pred_fallthru
        _
    $region12: #{tpu_custom_call.1} parent=5 // pred_fallthru
      _
    %p299 = scmp.lt.s32.totalorder %s16, 2
    // Predicated region
    $region49: #{tpu_custom_call.1} parent=5 // pred_check
      %p300 = pneg %p299
    $region50: #{tpu_custom_call.1} parent=5 // pred_check_branch
      %302 = sbr.rel (%p300) target = $region52
    $region51: #{tpu_custom_call.1} parent=5 // pred_region
      // Predicated region
      $region53: #{tpu_custom_call.1} parent=51 // pred_check
        %p303 = pneg %p36
      $region54: #{tpu_custom_call.1} parent=51 // pred_check_branch
        %305 = sbr.rel (%p303) target = $region56
      $region55: #{tpu_custom_call.1} parent=51 // pred_region
        %s306 = smul.u32 8, %s16
        %p307 = scmp.lt.s32.totalorder %s306, 15
        %s308 = scalar_select %p307, %s306, 15
        %s309 = smul.addr %s308, 8
        %s310 = scalar_lea.vmem %s0, %s309
        %s311 = smul.u32 8, %s16
      $region56: #{tpu_custom_call.1} parent=51 // pred_fallthru
        _
    $region52: #{tpu_custom_call.1} parent=5 // pred_fallthru
      _
    %p312 = scmp.le.s32.totalorder 1, %s16
    %p313 = scmp.lt.s32.totalorder %s16, 3
    %p314 = pnand %p312, %p313
    %p315 = pneg %p314
    // Predicated region
    $region57: #{tpu_custom_call.1} parent=5 // pred_check
      _
    $region58: #{tpu_custom_call.1} parent=5 // pred_check_branch
      %317 = sbr.rel (%p314) target = $region60
    $region59: #{tpu_custom_call.1} parent=5 // pred_region
      %s318 = ssub.s32 %s16, 1
      %s319 = smul.u32 8, %s21
      %p320 = scmp.lt.s32.totalorder %s319, 15
      %s321 = scalar_select %p320, %s319, 15
      %s322 = smul.addr %s321, 8
      %s323 = scalar_lea.vmem %s0, %s322
      %p324 = pneg %p42
      %p325 = pneg %p39
      %p326 = pneg %p63
      %p327 = pneg %p60
      %p328 = pneg %p84
      %p329 = pneg %p81
      %p330 = pneg %p105
      %p331 = pneg %p102
      %p332 = pneg %p126
      %p333 = pneg %p123
      %p334 = pneg %p147
      %p335 = pneg %p144
      %p336 = pneg %p168
      %p337 = pneg %p165
      %p338 = pneg %p189
      %p339 = pneg %p186
      %p340 = pneg %p210
      %p341 = pneg %p207
      %p342 = pneg %p231
      %p343 = pneg %p228
      %p344 = pneg %p257
      %p345 = pneg %p254
      %s346 = smul.u32 8, %s21
      %p347 = scmp.lt.s32.totalorder %s346, 15
      %s348 = scalar_select %p347, %s346, 15
      %s349 = smul.addr %s348, 8
      %s350 = scalar_lea.vmem %s10, %s349
      %s351 = smul.u32 8, %s21
      %p352 = scmp.lt.s32.totalorder %s351, 15
      %s353 = scalar_select %p352, %s351, 15
      %s354 = smul.addr %s353, 8
      %s355 = scalar_lea.vmem %s0, %s354
      %s356 = smul.u32 8, %s21
      %s357 = smul.u32 8, %s21
      %p358 = scmp.lt.s32.totalorder %s357, 15
      %s359 = scalar_select %p358, %s357, 15
      %s360 = smul.addr %s359, 8
      %s361 = scalar_lea.vmem %s10, %s360
      %s362 = smul.u32 8, %s21
      %vm363 = vcmask 31744
      %364 = vst.msk [vmem:[#allocation2] sm:$0xff] %vm363, 0.0
      %vm365 = vcmask 25600
      %366 = vst.msk [vmem:[#allocation2 + $0x8] sm:$0x3] %vm365, 0.0
      %367 = vst.msk [vmem:[#allocation2 + $0x10] sm:$0xff] %vm363, 0.0
      %368 = vst.msk [vmem:[#allocation2 + $0x18] sm:$0x3] %vm365, 0.0
      %369 = vst.msk [vmem:[#allocation2 + $0x20] sm:$0xff] %vm363, 0.0
      %370 = vst.msk [vmem:[#allocation2 + $0x28] sm:$0x3] %vm365, 0.0
      %371 = vst.msk [vmem:[#allocation2 + $0x30] sm:$0xff] %vm363, 0.0
      %372 = vst.msk [vmem:[#allocation2 + $0x38] sm:$0x3] %vm365, 0.0
      %373 = vst.msk [vmem:[#allocation2 + $0x40] sm:$0xff] %vm363, 0.0
      %374 = vst.msk [vmem:[#allocation2 + $0x48] sm:$0x3] %vm365, 0.0
      %375 = vst.msk [vmem:[#allocation2 + $0x50] sm:$0xff] %vm363, 0.0
      %376 = vst.msk [vmem:[#allocation2 + $0x58] sm:$0x3] %vm365, 0.0
      %377 = vst.msk [vmem:[#allocation2 + $0x60] sm:$0xff] %vm363, 0.0
      %378 = vst.msk [vmem:[#allocation2 + $0x68] sm:$0x3] %vm365, 0.0
      %379 = vst.msk [vmem:[#allocation2 + $0x70] sm:$0xff] %vm363, 0.0
      %380 = vst.msk [vmem:[#allocation2 + $0x78] sm:$0x3] %vm365, 0.0
      %381 = vst.msk [vmem:[#allocation2 + $0x80] sm:$0xff] %vm363, 0.0
      %382 = vst.msk [vmem:[#allocation2 + $0x88] sm:$0x3] %vm365, 0.0
      %383 = vst.msk [vmem:[#allocation2 + $0x90] sm:$0xff] %vm363, 0.0
      %384 = vst.msk [vmem:[#allocation2 + $0x98] sm:$0x3] %vm365, 0.0
      %v385 = vld [vmem:[%s355] sm:$0xff]
      %v386 = vld [vmem:[%s355 + $0x8] sm:$0xff]
      %v387 = vld [vmem:[%s355 + $0x10] sm:$0xff]
      %v388 = vld [vmem:[%s355 + $0x18] sm:$0xff]
      %v389 = vld [vmem:[%s355 + $0x20] sm:$0xff]
      %v390 = vld [vmem:[%s355 + $0x28] sm:$0xff]
      %v391 = vld [vmem:[%s355 + $0x30] sm:$0xff]
      %v392 = vld [vmem:[%s355 + $0x38] sm:$0xff]
      %v393 = vld [vmem:[%s1] sm:$0xff]
      %v394 = vld [vmem:[%s1 + $0x8] sm:$0xff]
      %vm395 = vcmask 130048
      %v397 = vsel %vm395, %v385, 0
      %v400 = vsel %vm395, %v386, 0
      %v403 = vsel %vm395, %v387, 0
      %v406 = vsel %vm395, %v388, 0
      %v409 = vsel %vm395, %v389, 0
      %v412 = vsel %vm395, %v390, 0
      %v415 = vsel %vm395, %v391, 0
      %v418 = vsel %vm395, %v392, 0
      %420 = vmatpush.msra.mxu0 0.0
      %421 = vmatpush.msra.mxu0 0.0
      %422 = vmatpush.msra.mxu0 0.0
      %423 = vmatpush.msra.mxu0 0.0
      %424 = vmatpush.msra.mxu0 0.0
      %425 = vmatpush.msra.mxu0 0.0
      %426 = vmatpush.msra.mxu0 0.0
      %427 = vmatpush.msra.mxu0 0.0
      %428 = vmatpush.msra.mxu0 0.0
      %429 = vmatpush.msra.mxu0 0.0
      %430 = vmatpush.msra.mxu0 0.0
      %431 = vmatpush.msra.mxu0 0.0
      %432 = vmatpush.msra.mxu0 0.0
      %433 = vmatpush.msra.mxu0 0.0
      %434 = vmatpush.msra.mxu0 %v394
      %435 = vmatpush.msra.mxu0 %v393
      %436 = vmatmul.f32.gmra.mxu0 %v397
      %v437 = vpop.f32.mrf.mxu0
      %v438 = vadd.f32 0.0, %v437
      %439 = vmatmul.f32.gmra.mxu0 %v400
      %v440 = vpop.f32.mrf.mxu0
      %v441 = vadd.f32 0.0, %v440
      %442 = vmatmul.f32.gmra.mxu0 %v403
      %v443 = vpop.f32.mrf.mxu0
      %v444 = vadd.f32 0.0, %v443
      %445 = vmatmul.f32.gmra.mxu0 %v406
      %v446 = vpop.f32.mrf.mxu0
      %v447 = vadd.f32 0.0, %v446
      %448 = vmatmul.f32.gmra.mxu0 %v409
      %v449 = vpop.f32.mrf.mxu0
      %v450 = vadd.f32 0.0, %v449
      %451 = vmatmul.f32.gmra.mxu0 %v412
      %v452 = vpop.f32.mrf.mxu0
      %v453 = vadd.f32 0.0, %v452
      %454 = vmatmul.f32.gmra.mxu0 %v415
      %v455 = vpop.f32.mrf.mxu0
      %v456 = vadd.f32 0.0, %v455
      %457 = vmatmul.f32.gmra.mxu0 %v418
      %v458 = vpop.f32.mrf.mxu0
      %v459 = vadd.f32 0.0, %v458
      %460 = vdwg.mxu0
      %v461 = vld [vmem:[%s2] sm:$0x1]
      %v463 = vperm.slane %v461, 0
      %v465 = vmul.f32 %v438, %v463
      %v466 = vmul.f32 %v441, %v463
      %v467 = vmul.f32 %v444, %v463
      %v468 = vmul.f32 %v447, %v463
      %v469 = vmul.f32 %v450, %v463
      %v470 = vmul.f32 %v453, %v463
      %v471 = vmul.f32 %v456, %v463
      %v472 = vmul.f32 %v459, %v463
      %v473 = vld [vmem:[%s3] sm:$0x1]
      %v475 = vperm.slane %v473, 0
      %v477 = vadd.f32 %v465, %v475
      %v478 = vadd.f32 %v466, %v475
      %v479 = vadd.f32 %v467, %v475
      %v480 = vadd.f32 %v468, %v475
      %v481 = vadd.f32 %v469, %v475
      %v482 = vadd.f32 %v470, %v475
      %v483 = vadd.f32 %v471, %v475
      %v484 = vadd.f32 %v472, %v475
      %v485 = vmax.f32 %v477, 0.0
      %v486 = vmax.f32 %v478, 0.0
      %v487 = vmax.f32 %v479, 0.0
      %v488 = vmax.f32 %v480, 0.0
      %v489 = vmax.f32 %v481, 0.0
      %v490 = vmax.f32 %v482, 0.0
      %v491 = vmax.f32 %v483, 0.0
      %v492 = vmax.f32 %v484, 0.0
      %v493 = vld [vmem:[%s5] sm:$0x1]
      %v494 = vld [vmem:[%s6] sm:$0x1]
      %v495 = vld [vmem:[%s4] sm:$0xff]
      %v496 = vld [vmem:[%s4 + $0x8] sm:$0xff]
      %v497 = vld [vmem:[%s4 + $0x10] sm:$0xff]
      %v498 = vld [vmem:[%s4 + $0x18] sm:$0xff]
      %v499 = vld [vmem:[%s4 + $0x20] sm:$0xf]
      %508 = vrot.lane.b32.xlu0 %v485, 124
      %v509 = vpop.permute.xlu0 %508
      %510 = vrot.lane.b32.xlu0 %v486, 124
      %v511 = vpop.permute.xlu0 %510
      %512 = vrot.lane.b32.xlu0 %v487, 124
      %v513 = vpop.permute.xlu0 %512
      %514 = vrot.lane.b32.xlu0 %v488, 124
      %v515 = vpop.permute.xlu0 %514
      %516 = vrot.lane.b32.xlu0 %v489, 124
      %v517 = vpop.permute.xlu0 %516
      %518 = vrot.lane.b32.xlu0 %v490, 124
      %v519 = vpop.permute.xlu0 %518
      %520 = vrot.lane.b32.xlu0 %v491, 124
      %v521 = vpop.permute.xlu0 %520
      %522 = vrot.lane.b32.xlu0 %v492, 124
      %v523 = vpop.permute.xlu0 %522
      %s532 = scalar_lea.vmem [#allocation2], 16
      %533 = vst.msk [vmem:[%s532 + $0x1] sm:$0xff] %vm363, %v509
      %534 = vst.msk [vmem:[%s532 + $0x11] sm:$0xff] %vm363, %v511
      %535 = vst.msk [vmem:[%s532 + $0x21] sm:$0xff] %vm363, %v513
      %536 = vst.msk [vmem:[%s532 + $0x31] sm:$0xff] %vm363, %v515
      %537 = vst.msk [vmem:[%s532 + $0x41] sm:$0xff] %vm363, %v517
      %538 = vst.msk [vmem:[%s532 + $0x51] sm:$0xff] %vm363, %v519
      %539 = vst.msk [vmem:[%s532 + $0x61] sm:$0xff] %vm363, %v521
      %540 = vst.msk [vmem:[%s532 + $0x71] sm:$0xff] %vm363, %v523
      %v541 = vld [vmem:[#allocation2] sm:$0xff]
      %v542 = vld [vmem:[#allocation2 + $0x10] sm:$0xff]
      %v543 = vld [vmem:[#allocation2 + $0x20] sm:$0xff]
      %v544 = vld [vmem:[#allocation2 + $0x30] sm:$0xff]
      %v545 = vld [vmem:[#allocation2 + $0x40] sm:$0xff]
      %v546 = vld [vmem:[#allocation2 + $0x50] sm:$0xff]
      %v547 = vld [vmem:[#allocation2 + $0x60] sm:$0xff]
      %v548 = vld [vmem:[#allocation2 + $0x70] sm:$0xff]
      %v549 = vld [vmem:[#allocation2 + $0x1] sm:$0xff]
      %v550 = vld [vmem:[#allocation2 + $0x11] sm:$0xff]
      %v551 = vld [vmem:[#allocation2 + $0x21] sm:$0xff]
      %v552 = vld [vmem:[#allocation2 + $0x31] sm:$0xff]
      %v553 = vld [vmem:[#allocation2 + $0x41] sm:$0xff]
      %v554 = vld [vmem:[#allocation2 + $0x51] sm:$0xff]
      %v555 = vld [vmem:[#allocation2 + $0x61] sm:$0xff]
      %v556 = vld [vmem:[#allocation2 + $0x71] sm:$0xff]
      %v557 = vld [vmem:[#allocation2 + $0x2] sm:$0xff]
      %v558 = vld [vmem:[#allocation2 + $0x12] sm:$0xff]
      %v559 = vld [vmem:[#allocation2 + $0x22] sm:$0xff]
      %v560 = vld [vmem:[#allocation2 + $0x32] sm:$0xff]
      %v561 = vld [vmem:[#allocation2 + $0x42] sm:$0xff]
      %v562 = vld [vmem:[#allocation2 + $0x52] sm:$0xff]
      %v563 = vld [vmem:[#allocation2 + $0x62] sm:$0xff]
      %v564 = vld [vmem:[#allocation2 + $0x72] sm:$0xff]
      %v565 = vld [vmem:[%s532] sm:$0xff]
      %v566 = vld [vmem:[%s532 + $0x10] sm:$0xff]
      %v567 = vld [vmem:[%s532 + $0x20] sm:$0xff]
      %v568 = vld [vmem:[%s532 + $0x30] sm:$0xff]
      %v569 = vld [vmem:[%s532 + $0x40] sm:$0xff]
      %v570 = vld [vmem:[%s532 + $0x50] sm:$0xff]
      %v571 = vld [vmem:[%s532 + $0x60] sm:$0xff]
      %v572 = vld [vmem:[%s532 + $0x70] sm:$0xff]
      %v573 = vld [vmem:[%s532 + $0x1] sm:$0xff]
      %v574 = vld [vmem:[%s532 + $0x11] sm:$0xff]
      %v575 = vld [vmem:[%s532 + $0x21] sm:$0xff]
      %v576 = vld [vmem:[%s532 + $0x31] sm:$0xff]
      %v577 = vld [vmem:[%s532 + $0x41] sm:$0xff]
      %v578 = vld [vmem:[%s532 + $0x51] sm:$0xff]
      %v579 = vld [vmem:[%s532 + $0x61] sm:$0xff]
      %v580 = vld [vmem:[%s532 + $0x71] sm:$0xff]
      %v581 = vld [vmem:[%s532 + $0x2] sm:$0xff]
      %v582 = vld [vmem:[%s532 + $0x12] sm:$0xff]
      %v583 = vld [vmem:[%s532 + $0x22] sm:$0xff]
      %v584 = vld [vmem:[%s532 + $0x32] sm:$0xff]
      %v585 = vld [vmem:[%s532 + $0x42] sm:$0xff]
      %v586 = vld [vmem:[%s532 + $0x52] sm:$0xff]
      %v587 = vld [vmem:[%s532 + $0x62] sm:$0xff]
      %v588 = vld [vmem:[%s532 + $0x72] sm:$0xff]
      %s589 = scalar_lea.vmem [#allocation2], 32
      %v590 = vld [vmem:[%s589] sm:$0xff]
      %v591 = vld [vmem:[%s589 + $0x10] sm:$0xff]
      %v592 = vld [vmem:[%s589 + $0x20] sm:$0xff]
      %v593 = vld [vmem:[%s589 + $0x30] sm:$0xff]
      %v594 = vld [vmem:[%s589 + $0x40] sm:$0xff]
      %v595 = vld [vmem:[%s589 + $0x50] sm:$0xff]
      %v596 = vld [vmem:[%s589 + $0x60] sm:$0xff]
      %v597 = vld [vmem:[%s589 + $0x70] sm:$0xff]
      %v598 = vld [vmem:[%s589 + $0x1] sm:$0xff]
      %v599 = vld [vmem:[%s589 + $0x11] sm:$0xff]
      %v600 = vld [vmem:[%s589 + $0x21] sm:$0xff]
      %v601 = vld [vmem:[%s589 + $0x31] sm:$0xff]
      %v602 = vld [vmem:[%s589 + $0x41] sm:$0xff]
      %v603 = vld [vmem:[%s589 + $0x51] sm:$0xff]
      %v604 = vld [vmem:[%s589 + $0x61] sm:$0xff]
      %v605 = vld [vmem:[%s589 + $0x71] sm:$0xff]
      %v606 = vld [vmem:[%s589 + $0x2] sm:$0xff]
      %v607 = vld [vmem:[%s589 + $0x12] sm:$0xff]
      %v608 = vld [vmem:[%s589 + $0x22] sm:$0xff]
      %v609 = vld [vmem:[%s589 + $0x32] sm:$0xff]
      %v610 = vld [vmem:[%s589 + $0x42] sm:$0xff]
      %v611 = vld [vmem:[%s589 + $0x52] sm:$0xff]
      %v612 = vld [vmem:[%s589 + $0x62] sm:$0xff]
      %v613 = vld [vmem:[%s589 + $0x72] sm:$0xff]
      %622 = vrot.lane.b32.xlu0 %v549, 4
      %v623 = vpop.permute.xlu0 %622
      %624 = vrot.lane.b32.xlu0 %v550, 4
      %v625 = vpop.permute.xlu0 %624
      %626 = vrot.lane.b32.xlu0 %v551, 4
      %v627 = vpop.permute.xlu0 %626
      %628 = vrot.lane.b32.xlu0 %v552, 4
      %v629 = vpop.permute.xlu0 %628
      %630 = vrot.lane.b32.xlu0 %v553, 4
      %v631 = vpop.permute.xlu0 %630
      %632 = vrot.lane.b32.xlu0 %v554, 4
      %v633 = vpop.permute.xlu0 %632
      %634 = vrot.lane.b32.xlu0 %v555, 4
      %v635 = vpop.permute.xlu0 %634
      %636 = vrot.lane.b32.xlu0 %v556, 4
      %v637 = vpop.permute.xlu0 %636
      %654 = vrot.lane.b32.xlu0 %v557, 8
      %v655 = vpop.permute.xlu0 %654
      %656 = vrot.lane.b32.xlu0 %v558, 8
      %v657 = vpop.permute.xlu0 %656
      %658 = vrot.lane.b32.xlu0 %v559, 8
      %v659 = vpop.permute.xlu0 %658
      %660 = vrot.lane.b32.xlu0 %v560, 8
      %v661 = vpop.permute.xlu0 %660
      %662 = vrot.lane.b32.xlu0 %v561, 8
      %v663 = vpop.permute.xlu0 %662
      %664 = vrot.lane.b32.xlu0 %v562, 8
      %v665 = vpop.permute.xlu0 %664
      %666 = vrot.lane.b32.xlu0 %v563, 8
      %v667 = vpop.permute.xlu0 %666
      %668 = vrot.lane.b32.xlu0 %v564, 8
      %v669 = vpop.permute.xlu0 %668
      %686 = vrot.lane.b32.xlu0 %v565, 12
      %v687 = vpop.permute.xlu0 %686
      %688 = vrot.lane.b32.xlu0 %v566, 12
      %v689 = vpop.permute.xlu0 %688
      %690 = vrot.lane.b32.xlu0 %v567, 12
      %v691 = vpop.permute.xlu0 %690
      %692 = vrot.lane.b32.xlu0 %v568, 12
      %v693 = vpop.permute.xlu0 %692
      %694 = vrot.lane.b32.xlu0 %v569, 12
      %v695 = vpop.permute.xlu0 %694
      %696 = vrot.lane.b32.xlu0 %v570, 12
      %v697 = vpop.permute.xlu0 %696
      %698 = vrot.lane.b32.xlu0 %v571, 12
      %v699 = vpop.permute.xlu0 %698
      %700 = vrot.lane.b32.xlu0 %v572, 12
      %v701 = vpop.permute.xlu0 %700
      %718 = vrot.lane.b32.xlu0 %v573, 16
      %v719 = vpop.permute.xlu0 %718
      %720 = vrot.lane.b32.xlu0 %v574, 16
      %v721 = vpop.permute.xlu0 %720
      %722 = vrot.lane.b32.xlu0 %v575, 16
      %v723 = vpop.permute.xlu0 %722
      %724 = vrot.lane.b32.xlu0 %v576, 16
      %v725 = vpop.permute.xlu0 %724
      %726 = vrot.lane.b32.xlu0 %v577, 16
      %v727 = vpop.permute.xlu0 %726
      %728 = vrot.lane.b32.xlu0 %v578, 16
      %v729 = vpop.permute.xlu0 %728
      %730 = vrot.lane.b32.xlu0 %v579, 16
      %v731 = vpop.permute.xlu0 %730
      %732 = vrot.lane.b32.xlu0 %v580, 16
      %v733 = vpop.permute.xlu0 %732
      %750 = vrot.lane.b32.xlu0 %v581, 20
      %v751 = vpop.permute.xlu0 %750
      %752 = vrot.lane.b32.xlu0 %v582, 20
      %v753 = vpop.permute.xlu0 %752
      %754 = vrot.lane.b32.xlu0 %v583, 20
      %v755 = vpop.permute.xlu0 %754
      %756 = vrot.lane.b32.xlu0 %v584, 20
      %v757 = vpop.permute.xlu0 %756
      %758 = vrot.lane.b32.xlu0 %v585, 20
      %v759 = vpop.permute.xlu0 %758
      %760 = vrot.lane.b32.xlu0 %v586, 20
      %v761 = vpop.permute.xlu0 %760
      %762 = vrot.lane.b32.xlu0 %v587, 20
      %v763 = vpop.permute.xlu0 %762
      %764 = vrot.lane.b32.xlu0 %v588, 20
      %v765 = vpop.permute.xlu0 %764
      %782 = vrot.lane.b32.xlu0 %v590, 24
      %v783 = vpop.permute.xlu0 %782
      %784 = vrot.lane.b32.xlu0 %v591, 24
      %v785 = vpop.permute.xlu0 %784
      %786 = vrot.lane.b32.xlu0 %v592, 24
      %v787 = vpop.permute.xlu0 %786
      %788 = vrot.lane.b32.xlu0 %v593, 24
      %v789 = vpop.permute.xlu0 %788
      %790 = vrot.lane.b32.xlu0 %v594, 24
      %v791 = vpop.permute.xlu0 %790
      %792 = vrot.lane.b32.xlu0 %v595, 24
      %v793 = vpop.permute.xlu0 %792
      %794 = vrot.lane.b32.xlu0 %v596, 24
      %v795 = vpop.permute.xlu0 %794
      %796 = vrot.lane.b32.xlu0 %v597, 24
      %v797 = vpop.permute.xlu0 %796
      %814 = vrot.lane.b32.xlu0 %v598, 28
      %v815 = vpop.permute.xlu0 %814
      %816 = vrot.lane.b32.xlu0 %v599, 28
      %v817 = vpop.permute.xlu0 %816
      %818 = vrot.lane.b32.xlu0 %v600, 28
      %v819 = vpop.permute.xlu0 %818
      %820 = vrot.lane.b32.xlu0 %v601, 28
      %v821 = vpop.permute.xlu0 %820
      %822 = vrot.lane.b32.xlu0 %v602, 28
      %v823 = vpop.permute.xlu0 %822
      %824 = vrot.lane.b32.xlu0 %v603, 28
      %v825 = vpop.permute.xlu0 %824
      %826 = vrot.lane.b32.xlu0 %v604, 28
      %v827 = vpop.permute.xlu0 %826
      %828 = vrot.lane.b32.xlu0 %v605, 28
      %v829 = vpop.permute.xlu0 %828
      %846 = vrot.lane.b32.xlu0 %v606, 32
      %v847 = vpop.permute.xlu0 %846
      %848 = vrot.lane.b32.xlu0 %v607, 32
      %v849 = vpop.permute.xlu0 %848
      %850 = vrot.lane.b32.xlu0 %v608, 32
      %v851 = vpop.permute.xlu0 %850
      %852 = vrot.lane.b32.xlu0 %v609, 32
      %v853 = vpop.permute.xlu0 %852
      %854 = vrot.lane.b32.xlu0 %v610, 32
      %v855 = vpop.permute.xlu0 %854
      %856 = vrot.lane.b32.xlu0 %v611, 32
      %v857 = vpop.permute.xlu0 %856
      %858 = vrot.lane.b32.xlu0 %v612, 32
      %v859 = vpop.permute.xlu0 %858
      %860 = vrot.lane.b32.xlu0 %v613, 32
      %v861 = vpop.permute.xlu0 %860
      %v870 = vsel %vm363, %v541, %v623
      %v871 = vsel %vm363, %v542, %v625
      %v872 = vsel %vm363, %v543, %v627
      %v873 = vsel %vm363, %v544, %v629
      %v874 = vsel %vm363, %v545, %v631
      %v875 = vsel %vm363, %v546, %v633
      %v876 = vsel %vm363, %v547, %v635
      %v877 = vsel %vm363, %v548, %v637
      %vm878 = vcmask 64512
      %v879 = vsel %vm878, %v870, %v655
      %v880 = vsel %vm878, %v871, %v657
      %v881 = vsel %vm878, %v872, %v659
      %v882 = vsel %vm878, %v873, %v661
      %v883 = vsel %vm878, %v874, %v663
      %v884 = vsel %vm878, %v875, %v665
      %v885 = vsel %vm878, %v876, %v667
      %v886 = vsel %vm878, %v877, %v669
      %vm887 = vcmask 97280
      %v888 = vsel %vm887, %v879, %v687
      %v889 = vsel %vm887, %v880, %v689
      %v890 = vsel %vm887, %v881, %v691
      %v891 = vsel %vm887, %v882, %v693
      %v892 = vsel %vm887, %v883, %v695
      %v893 = vsel %vm887, %v884, %v697
      %v894 = vsel %vm887, %v885, %v699
      %v895 = vsel %vm887, %v886, %v701
      %v896 = vsel %vm395, %v888, %v719
      %v897 = vsel %vm395, %v889, %v721
      %v898 = vsel %vm395, %v890, %v723
      %v899 = vsel %vm395, %v891, %v725
      %v900 = vsel %vm395, %v892, %v727
      %v901 = vsel %vm395, %v893, %v729
      %v902 = vsel %vm395, %v894, %v731
      %v903 = vsel %vm395, %v895, %v733
      %vm904 = vcmask 162816
      %v905 = vsel %vm904, %v896, %v751
      %v906 = vsel %vm904, %v897, %v753
      %v907 = vsel %vm904, %v898, %v755
      %v908 = vsel %vm904, %v899, %v757
      %v909 = vsel %vm904, %v900, %v759
      %v910 = vsel %vm904, %v901, %v761
      %v911 = vsel %vm904, %v902, %v763
      %v912 = vsel %vm904, %v903, %v765
      %vm913 = vcmask 195584
      %v914 = vsel %vm913, %v905, %v783
      %v915 = vsel %vm913, %v906, %v785
      %v916 = vsel %vm913, %v907, %v787
      %v917 = vsel %vm913, %v908, %v789
      %v918 = vsel %vm913, %v909, %v791
      %v919 = vsel %vm913, %v910, %v793
      %v920 = vsel %vm913, %v911, %v795
      %v921 = vsel %vm913, %v912, %v797
      %vm922 = vcmask 228352
      %v923 = vsel %vm922, %v914, %v815
      %v924 = vsel %vm922, %v915, %v817
      %v925 = vsel %vm922, %v916, %v819
      %v926 = vsel %vm922, %v917, %v821
      %v927 = vsel %vm922, %v918, %v823
      %v928 = vsel %vm922, %v919, %v825
      %v929 = vsel %vm922, %v920, %v827
      %v930 = vsel %vm922, %v921, %v829
      %vm931 = vcmask 261120
      %v932 = vsel %vm931, %v923, %v847
      %v933 = vsel %vm931, %v924, %v849
      %v934 = vsel %vm931, %v925, %v851
      %v935 = vsel %vm931, %v926, %v853
      %v936 = vsel %vm931, %v927, %v855
      %v937 = vsel %vm931, %v928, %v857
      %v938 = vsel %vm931, %v929, %v859
      %v939 = vsel %vm931, %v930, %v861
      %vm940 = vcmask 293888
      %v942 = vsel %vm940, %v932, 0
      %v945 = vsel %vm940, %v933, 0
      %v948 = vsel %vm940, %v934, 0
      %v951 = vsel %vm940, %v935, 0
      %v954 = vsel %vm940, %v936, 0
      %v957 = vsel %vm940, %v937, 0
      %v960 = vsel %vm940, %v938, 0
      %v963 = vsel %vm940, %v939, 0
      %vm965 = vcmask 1043456
      %v967 = vsel %vm965, %v499, 0
      %969 = vmatpush.msra.mxu0 0.0
      %970 = vmatpush.msra.mxu0 0.0
      %971 = vmatpush.msra.mxu0 0.0
      %972 = vmatpush.msra.mxu0 0.0
      %973 = vmatpush.msra.mxu0 0.0
      %974 = vmatpush.msra.mxu0 0.0
      %975 = vmatpush.msra.mxu0 0.0
      %976 = vmatpush.msra.mxu0 0.0
      %977 = vmatpush.msra.mxu0 0.0
      %978 = vmatpush.msra.mxu0 0.0
      %979 = vmatpush.msra.mxu0 0.0
      %980 = vmatpush.msra.mxu0 %v967
      %981 = vmatpush.msra.mxu0 %v498
      %982 = vmatpush.msra.mxu0 %v497
      %983 = vmatpush.msra.mxu0 %v496
      %984 = vmatpush.msra.mxu0 %v495
      %985 = vmatmul.f32.gmra.mxu0 %v942
      %v986 = vpop.f32.mrf.mxu0
      %v987 = vadd.f32 0.0, %v986
      %988 = vmatmul.f32.gmra.mxu0 %v945
      %v989 = vpop.f32.mrf.mxu0
      %v990 = vadd.f32 0.0, %v989
      %991 = vmatmul.f32.gmra.mxu0 %v948
      %v992 = vpop.f32.mrf.mxu0
      %v993 = vadd.f32 0.0, %v992
      %994 = vmatmul.f32.gmra.mxu0 %v951
      %v995 = vpop.f32.mrf.mxu0
      %v996 = vadd.f32 0.0, %v995
      %997 = vmatmul.f32.gmra.mxu0 %v954
      %v998 = vpop.f32.mrf.mxu0
      %v999 = vadd.f32 0.0, %v998
      %1000 = vmatmul.f32.gmra.mxu0 %v957
      %v1001 = vpop.f32.mrf.mxu0
      %v1002 = vadd.f32 0.0, %v1001
      %1003 = vmatmul.f32.gmra.mxu0 %v960
      %v1004 = vpop.f32.mrf.mxu0
      %v1005 = vadd.f32 0.0, %v1004
      %1006 = vmatmul.f32.gmra.mxu0 %v963
      %v1007 = vpop.f32.mrf.mxu0
      %v1008 = vadd.f32 0.0, %v1007
      %1009 = vdwg.mxu0
      %v1011 = vperm.slane %v493, 0
      %v1013 = vmul.f32 %v987, %v1011
      %v1014 = vmul.f32 %v990, %v1011
      %v1015 = vmul.f32 %v993, %v1011
      %v1016 = vmul.f32 %v996, %v1011
      %v1017 = vmul.f32 %v999, %v1011
      %v1018 = vmul.f32 %v1002, %v1011
      %v1019 = vmul.f32 %v1005, %v1011
      %v1020 = vmul.f32 %v1008, %v1011
      %v1022 = vperm.slane %v494, 0
      %v1024 = vadd.f32 %v1013, %v1022
      %v1025 = vadd.f32 %v1014, %v1022
      %v1026 = vadd.f32 %v1015, %v1022
      %v1027 = vadd.f32 %v1016, %v1022
      %v1028 = vadd.f32 %v1017, %v1022
      %v1029 = vadd.f32 %v1018, %v1022
      %v1030 = vadd.f32 %v1019, %v1022
      %v1031 = vadd.f32 %v1020, %v1022
      %v1032 = vmax.f32 %v1024, 0.0
      %v1033 = vmax.f32 %v1025, 0.0
      %v1034 = vmax.f32 %v1026, 0.0
      %v1035 = vmax.f32 %v1027, 0.0
      %v1036 = vmax.f32 %v1028, 0.0
      %v1037 = vmax.f32 %v1029, 0.0
      %v1038 = vmax.f32 %v1030, 0.0
      %v1039 = vmax.f32 %v1031, 0.0
      %1040 = vrot.lane.b32.xlu0 %v485, 120
      %v1041 = vpop.permute.xlu0 %1040
      %1042 = vrot.lane.b32.xlu0 %v486, 120
      %v1043 = vpop.permute.xlu0 %1042
      %1044 = vrot.lane.b32.xlu0 %v487, 120
      %v1045 = vpop.permute.xlu0 %1044
      %1046 = vrot.lane.b32.xlu0 %v488, 120
      %v1047 = vpop.permute.xlu0 %1046
      %1048 = vrot.lane.b32.xlu0 %v489, 120
      %v1049 = vpop.permute.xlu0 %1048
      %1050 = vrot.lane.b32.xlu0 %v490, 120
      %v1051 = vpop.permute.xlu0 %1050
      %1052 = vrot.lane.b32.xlu0 %v491, 120
      %v1053 = vpop.permute.xlu0 %1052
      %1054 = vrot.lane.b32.xlu0 %v492, 120
      %v1055 = vpop.permute.xlu0 %1054
      %v1064 = vadd.f32 %v1032, %v1041
      %v1065 = vadd.f32 %v1033, %v1043
      %v1066 = vadd.f32 %v1034, %v1045
      %v1067 = vadd.f32 %v1035, %v1047
      %v1068 = vadd.f32 %v1036, %v1049
      %v1069 = vadd.f32 %v1037, %v1051
      %v1070 = vadd.f32 %v1038, %v1053
      %v1071 = vadd.f32 %v1039, %v1055
      %1072 = vst.msk [vmem:[%s532 + $0x1] sm:$0xff] %vm363, %v1064
      %1073 = vst.msk [vmem:[%s532 + $0x11] sm:$0xff] %vm363, %v1065
      %1074 = vst.msk [vmem:[%s532 + $0x21] sm:$0xff] %vm363, %v1066
      %1075 = vst.msk [vmem:[%s532 + $0x31] sm:$0xff] %vm363, %v1067
      %1076 = vst.msk [vmem:[%s532 + $0x41] sm:$0xff] %vm363, %v1068
      %1077 = vst.msk [vmem:[%s532 + $0x51] sm:$0xff] %vm363, %v1069
      %1078 = vst.msk [vmem:[%s532 + $0x61] sm:$0xff] %vm363, %v1070
      %1079 = vst.msk [vmem:[%s532 + $0x71] sm:$0xff] %vm363, %v1071
      %v1080 = vld [vmem:[#allocation2] sm:$0xff]
      %v1081 = vld [vmem:[#allocation2 + $0x10] sm:$0xff]
      %v1082 = vld [vmem:[#allocation2 + $0x20] sm:$0xff]
      %v1083 = vld [vmem:[#allocation2 + $0x30] sm:$0xff]
      %v1084 = vld [vmem:[#allocation2 + $0x40] sm:$0xff]
      %v1085 = vld [vmem:[#allocation2 + $0x50] sm:$0xff]
      %v1086 = vld [vmem:[#allocation2 + $0x60] sm:$0xff]
      %v1087 = vld [vmem:[#allocation2 + $0x70] sm:$0xff]
      %v1088 = vld [vmem:[#allocation2 + $0x1] sm:$0xff]
      %v1089 = vld [vmem:[#allocation2 + $0x11] sm:$0xff]
      %v1090 = vld [vmem:[#allocation2 + $0x21] sm:$0xff]
      %v1091 = vld [vmem:[#allocation2 + $0x31] sm:$0xff]
      %v1092 = vld [vmem:[#allocation2 + $0x41] sm:$0xff]
      %v1093 = vld [vmem:[#allocation2 + $0x51] sm:$0xff]
      %v1094 = vld [vmem:[#allocation2 + $0x61] sm:$0xff]
      %v1095 = vld [vmem:[#allocation2 + $0x71] sm:$0xff]
      %v1096 = vld [vmem:[#allocation2 + $0x2] sm:$0xff]
      %v1097 = vld [vmem:[#allocation2 + $0x12] sm:$0xff]
      %v1098 = vld [vmem:[#allocation2 + $0x22] sm:$0xff]
      %v1099 = vld [vmem:[#allocation2 + $0x32] sm:$0xff]
      %v1100 = vld [vmem:[#allocation2 + $0x42] sm:$0xff]
      %v1101 = vld [vmem:[#allocation2 + $0x52] sm:$0xff]
      %v1102 = vld [vmem:[#allocation2 + $0x62] sm:$0xff]
      %v1103 = vld [vmem:[#allocation2 + $0x72] sm:$0xff]
      %v1104 = vld [vmem:[%s532] sm:$0xff]
      %v1105 = vld [vmem:[%s532 + $0x10] sm:$0xff]
      %v1106 = vld [vmem:[%s532 + $0x20] sm:$0xff]
      %v1107 = vld [vmem:[%s532 + $0x30] sm:$0xff]
      %v1108 = vld [vmem:[%s532 + $0x40] sm:$0xff]
      %v1109 = vld [vmem:[%s532 + $0x50] sm:$0xff]
      %v1110 = vld [vmem:[%s532 + $0x60] sm:$0xff]
      %v1111 = vld [vmem:[%s532 + $0x70] sm:$0xff]
      %v1112 = vld [vmem:[%s532 + $0x1] sm:$0xff]
      %v1113 = vld [vmem:[%s532 + $0x11] sm:$0xff]
      %v1114 = vld [vmem:[%s532 + $0x21] sm:$0xff]
      %v1115 = vld [vmem:[%s532 + $0x31] sm:$0xff]
      %v1116 = vld [vmem:[%s532 + $0x41] sm:$0xff]
      %v1117 = vld [vmem:[%s532 + $0x51] sm:$0xff]
      %v1118 = vld [vmem:[%s532 + $0x61] sm:$0xff]
      %v1119 = vld [vmem:[%s532 + $0x71] sm:$0xff]
      %v1120 = vld [vmem:[%s532 + $0x2] sm:$0xff]
      %v1121 = vld [vmem:[%s532 + $0x12] sm:$0xff]
      %v1122 = vld [vmem:[%s532 + $0x22] sm:$0xff]
      %v1123 = vld [vmem:[%s532 + $0x32] sm:$0xff]
      %v1124 = vld [vmem:[%s532 + $0x42] sm:$0xff]
      %v1125 = vld [vmem:[%s532 + $0x52] sm:$0xff]
      %v1126 = vld [vmem:[%s532 + $0x62] sm:$0xff]
      %v1127 = vld [vmem:[%s532 + $0x72] sm:$0xff]
      %v1128 = vld [vmem:[%s589] sm:$0xff]
      %v1129 = vld [vmem:[%s589 + $0x10] sm:$0xff]
      %v1130 = vld [vmem:[%s589 + $0x20] sm:$0xff]
      %v1131 = vld [vmem:[%s589 + $0x30] sm:$0xff]
      %v1132 = vld [vmem:[%s589 + $0x40] sm:$0xff]
      %v1133 = vld [vmem:[%s589 + $0x50] sm:$0xff]
      %v1134 = vld [vmem:[%s589 + $0x60] sm:$0xff]
      %v1135 = vld [vmem:[%s589 + $0x70] sm:$0xff]
      %v1136 = vld [vmem:[%s589 + $0x1] sm:$0xff]
      %v1137 = vld [vmem:[%s589 + $0x11] sm:$0xff]
      %v1138 = vld [vmem:[%s589 + $0x21] sm:$0xff]
      %v1139 = vld [vmem:[%s589 + $0x31] sm:$0xff]
      %v1140 = vld [vmem:[%s589 + $0x41] sm:$0xff]
      %v1141 = vld [vmem:[%s589 + $0x51] sm:$0xff]
      %v1142 = vld [vmem:[%s589 + $0x61] sm:$0xff]
      %v1143 = vld [vmem:[%s589 + $0x71] sm:$0xff]
      %v1144 = vld [vmem:[%s589 + $0x2] sm:$0xff]
      %v1145 = vld [vmem:[%s589 + $0x12] sm:$0xff]
      %v1146 = vld [vmem:[%s589 + $0x22] sm:$0xff]
      %v1147 = vld [vmem:[%s589 + $0x32] sm:$0xff]
      %v1148 = vld [vmem:[%s589 + $0x42] sm:$0xff]
      %v1149 = vld [vmem:[%s589 + $0x52] sm:$0xff]
      %v1150 = vld [vmem:[%s589 + $0x62] sm:$0xff]
      %v1151 = vld [vmem:[%s589 + $0x72] sm:$0xff]
      %1160 = vrot.lane.b32.xlu0 %v1088, 4
      %v1161 = vpop.permute.xlu0 %1160
      %1162 = vrot.lane.b32.xlu0 %v1089, 4
      %v1163 = vpop.permute.xlu0 %1162
      %1164 = vrot.lane.b32.xlu0 %v1090, 4
      %v1165 = vpop.permute.xlu0 %1164
      %1166 = vrot.lane.b32.xlu0 %v1091, 4
      %v1167 = vpop.permute.xlu0 %1166
      %1168 = vrot.lane.b32.xlu0 %v1092, 4
      %v1169 = vpop.permute.xlu0 %1168
      %1170 = vrot.lane.b32.xlu0 %v1093, 4
      %v1171 = vpop.permute.xlu0 %1170
      %1172 = vrot.lane.b32.xlu0 %v1094, 4
      %v1173 = vpop.permute.xlu0 %1172
      %1174 = vrot.lane.b32.xlu0 %v1095, 4
      %v1175 = vpop.permute.xlu0 %1174
      %1192 = vrot.lane.b32.xlu0 %v1096, 8
      %v1193 = vpop.permute.xlu0 %1192
      %1194 = vrot.lane.b32.xlu0 %v1097, 8
      %v1195 = vpop.permute.xlu0 %1194
      %1196 = vrot.lane.b32.xlu0 %v1098, 8
      %v1197 = vpop.permute.xlu0 %1196
      %1198 = vrot.lane.b32.xlu0 %v1099, 8
      %v1199 = vpop.permute.xlu0 %1198
      %1200 = vrot.lane.b32.xlu0 %v1100, 8
      %v1201 = vpop.permute.xlu0 %1200
      %1202 = vrot.lane.b32.xlu0 %v1101, 8
      %v1203 = vpop.permute.xlu0 %1202
      %1204 = vrot.lane.b32.xlu0 %v1102, 8
      %v1205 = vpop.permute.xlu0 %1204
      %1206 = vrot.lane.b32.xlu0 %v1103, 8
      %v1207 = vpop.permute.xlu0 %1206
      %1224 = vrot.lane.b32.xlu0 %v1104, 12
      %v1225 = vpop.permute.xlu0 %1224
      %1226 = vrot.lane.b32.xlu0 %v1105, 12
      %v1227 = vpop.permute.xlu0 %1226
      %1228 = vrot.lane.b32.xlu0 %v1106, 12
      %v1229 = vpop.permute.xlu0 %1228
      %1230 = vrot.lane.b32.xlu0 %v1107, 12
      %v1231 = vpop.permute.xlu0 %1230
      %1232 = vrot.lane.b32.xlu0 %v1108, 12
      %v1233 = vpop.permute.xlu0 %1232
      %1234 = vrot.lane.b32.xlu0 %v1109, 12
      %v1235 = vpop.permute.xlu0 %1234
      %1236 = vrot.lane.b32.xlu0 %v1110, 12
      %v1237 = vpop.permute.xlu0 %1236
      %1238 = vrot.lane.b32.xlu0 %v1111, 12
      %v1239 = vpop.permute.xlu0 %1238
      %1256 = vrot.lane.b32.xlu0 %v1112, 16
      %v1257 = vpop.permute.xlu0 %1256
      %1258 = vrot.lane.b32.xlu0 %v1113, 16
      %v1259 = vpop.permute.xlu0 %1258
      %1260 = vrot.lane.b32.xlu0 %v1114, 16
      %v1261 = vpop.permute.xlu0 %1260
      %1262 = vrot.lane.b32.xlu0 %v1115, 16
      %v1263 = vpop.permute.xlu0 %1262
      %1264 = vrot.lane.b32.xlu0 %v1116, 16
      %v1265 = vpop.permute.xlu0 %1264
      %1266 = vrot.lane.b32.xlu0 %v1117, 16
      %v1267 = vpop.permute.xlu0 %1266
      %1268 = vrot.lane.b32.xlu0 %v1118, 16
      %v1269 = vpop.permute.xlu0 %1268
      %1270 = vrot.lane.b32.xlu0 %v1119, 16
      %v1271 = vpop.permute.xlu0 %1270
      %1288 = vrot.lane.b32.xlu0 %v1120, 20
      %v1289 = vpop.permute.xlu0 %1288
      %1290 = vrot.lane.b32.xlu0 %v1121, 20
      %v1291 = vpop.permute.xlu0 %1290
      %1292 = vrot.lane.b32.xlu0 %v1122, 20
      %v1293 = vpop.permute.xlu0 %1292
      %1294 = vrot.lane.b32.xlu0 %v1123, 20
      %v1295 = vpop.permute.xlu0 %1294
      %1296 = vrot.lane.b32.xlu0 %v1124, 20
      %v1297 = vpop.permute.xlu0 %1296
      %1298 = vrot.lane.b32.xlu0 %v1125, 20
      %v1299 = vpop.permute.xlu0 %1298
      %1300 = vrot.lane.b32.xlu0 %v1126, 20
      %v1301 = vpop.permute.xlu0 %1300
      %1302 = vrot.lane.b32.xlu0 %v1127, 20
      %v1303 = vpop.permute.xlu0 %1302
      %1320 = vrot.lane.b32.xlu0 %v1128, 24
      %v1321 = vpop.permute.xlu0 %1320
      %1322 = vrot.lane.b32.xlu0 %v1129, 24
      %v1323 = vpop.permute.xlu0 %1322
      %1324 = vrot.lane.b32.xlu0 %v1130, 24
      %v1325 = vpop.permute.xlu0 %1324
      %1326 = vrot.lane.b32.xlu0 %v1131, 24
      %v1327 = vpop.permute.xlu0 %1326
      %1328 = vrot.lane.b32.xlu0 %v1132, 24
      %v1329 = vpop.permute.xlu0 %1328
      %1330 = vrot.lane.b32.xlu0 %v1133, 24
      %v1331 = vpop.permute.xlu0 %1330
      %1332 = vrot.lane.b32.xlu0 %v1134, 24
      %v1333 = vpop.permute.xlu0 %1332
      %1334 = vrot.lane.b32.xlu0 %v1135, 24
      %v1335 = vpop.permute.xlu0 %1334
      %1352 = vrot.lane.b32.xlu0 %v1136, 28
      %v1353 = vpop.permute.xlu0 %1352
      %1354 = vrot.lane.b32.xlu0 %v1137, 28
      %v1355 = vpop.permute.xlu0 %1354
      %1356 = vrot.lane.b32.xlu0 %v1138, 28
      %v1357 = vpop.permute.xlu0 %1356
      %1358 = vrot.lane.b32.xlu0 %v1139, 28
      %v1359 = vpop.permute.xlu0 %1358
      %1360 = vrot.lane.b32.xlu0 %v1140, 28
      %v1361 = vpop.permute.xlu0 %1360
      %1362 = vrot.lane.b32.xlu0 %v1141, 28
      %v1363 = vpop.permute.xlu0 %1362
      %1364 = vrot.lane.b32.xlu0 %v1142, 28
      %v1365 = vpop.permute.xlu0 %1364
      %1366 = vrot.lane.b32.xlu0 %v1143, 28
      %v1367 = vpop.permute.xlu0 %1366
      %1384 = vrot.lane.b32.xlu0 %v1144, 32
      %v1385 = vpop.permute.xlu0 %1384
      %1386 = vrot.lane.b32.xlu0 %v1145, 32
      %v1387 = vpop.permute.xlu0 %1386
      %1388 = vrot.lane.b32.xlu0 %v1146, 32
      %v1389 = vpop.permute.xlu0 %1388
      %1390 = vrot.lane.b32.xlu0 %v1147, 32
      %v1391 = vpop.permute.xlu0 %1390
      %1392 = vrot.lane.b32.xlu0 %v1148, 32
      %v1393 = vpop.permute.xlu0 %1392
      %1394 = vrot.lane.b32.xlu0 %v1149, 32
      %v1395 = vpop.permute.xlu0 %1394
      %1396 = vrot.lane.b32.xlu0 %v1150, 32
      %v1397 = vpop.permute.xlu0 %1396
      %1398 = vrot.lane.b32.xlu0 %v1151, 32
      %v1399 = vpop.permute.xlu0 %1398
      %v1408 = vsel %vm363, %v1080, %v1161
      %v1409 = vsel %vm363, %v1081, %v1163
      %v1410 = vsel %vm363, %v1082, %v1165
      %v1411 = vsel %vm363, %v1083, %v1167
      %v1412 = vsel %vm363, %v1084, %v1169
      %v1413 = vsel %vm363, %v1085, %v1171
      %v1414 = vsel %vm363, %v1086, %v1173
      %v1415 = vsel %vm363, %v1087, %v1175
      %v1416 = vsel %vm878, %v1408, %v1193
      %v1417 = vsel %vm878, %v1409, %v1195
      %v1418 = vsel %vm878, %v1410, %v1197
      %v1419 = vsel %vm878, %v1411, %v1199
      %v1420 = vsel %vm878, %v1412, %v1201
      %v1421 = vsel %vm878, %v1413, %v1203
      %v1422 = vsel %vm878, %v1414, %v1205
      %v1423 = vsel %vm878, %v1415, %v1207
      %v1424 = vsel %vm887, %v1416, %v1225
      %v1425 = vsel %vm887, %v1417, %v1227
      %v1426 = vsel %vm887, %v1418, %v1229
      %v1427 = vsel %vm887, %v1419, %v1231
      %v1428 = vsel %vm887, %v1420, %v1233
      %v1429 = vsel %vm887, %v1421, %v1235
      %v1430 = vsel %vm887, %v1422, %v1237
      %v1431 = vsel %vm887, %v1423, %v1239
      %v1432 = vsel %vm395, %v1424, %v1257
      %v1433 = vsel %vm395, %v1425, %v1259
      %v1434 = vsel %vm395, %v1426, %v1261
      %v1435 = vsel %vm395, %v1427, %v1263
      %v1436 = vsel %vm395, %v1428, %v1265
      %v1437 = vsel %vm395, %v1429, %v1267
      %v1438 = vsel %vm395, %v1430, %v1269
      %v1439 = vsel %vm395, %v1431, %v1271
      %v1440 = vsel %vm904, %v1432, %v1289
      %v1441 = vsel %vm904, %v1433, %v1291
      %v1442 = vsel %vm904, %v1434, %v1293
      %v1443 = vsel %vm904, %v1435, %v1295
      %v1444 = vsel %vm904, %v1436, %v1297
      %v1445 = vsel %vm904, %v1437, %v1299
      %v1446 = vsel %vm904, %v1438, %v1301
      %v1447 = vsel %vm904, %v1439, %v1303
      %v1448 = vsel %vm913, %v1440, %v1321
      %v1449 = vsel %vm913, %v1441, %v1323
      %v1450 = vsel %vm913, %v1442, %v1325
      %v1451 = vsel %vm913, %v1443, %v1327
      %v1452 = vsel %vm913, %v1444, %v1329
      %v1453 = vsel %vm913, %v1445, %v1331
      %v1454 = vsel %vm913, %v1446, %v1333
      %v1455 = vsel %vm913, %v1447, %v1335
      %v1456 = vsel %vm922, %v1448, %v1353
      %v1457 = vsel %vm922, %v1449, %v1355
      %v1458 = vsel %vm922, %v1450, %v1357
      %v1459 = vsel %vm922, %v1451, %v1359
      %v1460 = vsel %vm922, %v1452, %v1361
      %v1461 = vsel %vm922, %v1453, %v1363
      %v1462 = vsel %vm922, %v1454, %v1365
      %v1463 = vsel %vm922, %v1455, %v1367
      %v1464 = vsel %vm931, %v1456, %v1385
      %v1465 = vsel %vm931, %v1457, %v1387
      %v1466 = vsel %vm931, %v1458, %v1389
      %v1467 = vsel %vm931, %v1459, %v1391
      %v1468 = vsel %vm931, %v1460, %v1393
      %v1469 = vsel %vm931, %v1461, %v1395
      %v1470 = vsel %vm931, %v1462, %v1397
      %v1471 = vsel %vm931, %v1463, %v1399
      %v1473 = vsel %vm940, %v1464, 0
      %v1476 = vsel %vm940, %v1465, 0
      %v1479 = vsel %vm940, %v1466, 0
      %v1482 = vsel %vm940, %v1467, 0
      %v1485 = vsel %vm940, %v1468, 0
      %v1488 = vsel %vm940, %v1469, 0
      %v1491 = vsel %vm940, %v1470, 0
      %v1494 = vsel %vm940, %v1471, 0
      %1496 = vmatpush.msra.mxu0 0.0
      %1497 = vmatpush.msra.mxu0 0.0
      %1498 = vmatpush.msra.mxu0 0.0
      %1499 = vmatpush.msra.mxu0 0.0
      %1500 = vmatpush.msra.mxu0 0.0
      %1501 = vmatpush.msra.mxu0 0.0
      %1502 = vmatpush.msra.mxu0 0.0
      %1503 = vmatpush.msra.mxu0 0.0
      %1504 = vmatpush.msra.mxu0 0.0
      %1505 = vmatpush.msra.mxu0 0.0
      %1506 = vmatpush.msra.mxu0 0.0
      %1507 = vmatpush.msra.mxu0 %v967
      %1508 = vmatpush.msra.mxu0 %v498
      %1509 = vmatpush.msra.mxu0 %v497
      %1510 = vmatpush.msra.mxu0 %v496
      %1511 = vmatpush.msra.mxu0 %v495
      %1512 = vmatmul.f32.gmra.mxu0 %v1473
      %v1513 = vpop.f32.mrf.mxu0
      %v1514 = vadd.f32 0.0, %v1513
      %1515 = vmatmul.f32.gmra.mxu0 %v1476
      %v1516 = vpop.f32.mrf.mxu0
      %v1517 = vadd.f32 0.0, %v1516
      %1518 = vmatmul.f32.gmra.mxu0 %v1479
      %v1519 = vpop.f32.mrf.mxu0
      %v1520 = vadd.f32 0.0, %v1519
      %1521 = vmatmul.f32.gmra.mxu0 %v1482
      %v1522 = vpop.f32.mrf.mxu0
      %v1523 = vadd.f32 0.0, %v1522
      %1524 = vmatmul.f32.gmra.mxu0 %v1485
      %v1525 = vpop.f32.mrf.mxu0
      %v1526 = vadd.f32 0.0, %v1525
      %1527 = vmatmul.f32.gmra.mxu0 %v1488
      %v1528 = vpop.f32.mrf.mxu0
      %v1529 = vadd.f32 0.0, %v1528
      %1530 = vmatmul.f32.gmra.mxu0 %v1491
      %v1531 = vpop.f32.mrf.mxu0
      %v1532 = vadd.f32 0.0, %v1531
      %1533 = vmatmul.f32.gmra.mxu0 %v1494
      %v1534 = vpop.f32.mrf.mxu0
      %v1535 = vadd.f32 0.0, %v1534
      %1536 = vdwg.mxu0
      %v1537 = vmul.f32 %v1514, %v1011
      %v1538 = vmul.f32 %v1517, %v1011
      %v1539 = vmul.f32 %v1520, %v1011
      %v1540 = vmul.f32 %v1523, %v1011
      %v1541 = vmul.f32 %v1526, %v1011
      %v1542 = vmul.f32 %v1529, %v1011
      %v1543 = vmul.f32 %v1532, %v1011
      %v1544 = vmul.f32 %v1535, %v1011
      %v1545 = vadd.f32 %v1537, %v1022
      %v1546 = vadd.f32 %v1538, %v1022
      %v1547 = vadd.f32 %v1539, %v1022
      %v1548 = vadd.f32 %v1540, %v1022
      %v1549 = vadd.f32 %v1541, %v1022
      %v1550 = vadd.f32 %v1542, %v1022
      %v1551 = vadd.f32 %v1543, %v1022
      %v1552 = vadd.f32 %v1544, %v1022
      %v1553 = vmax.f32 %v1545, 0.0
      %v1554 = vmax.f32 %v1546, 0.0
      %v1555 = vmax.f32 %v1547, 0.0
      %v1556 = vmax.f32 %v1548, 0.0
      %v1557 = vmax.f32 %v1549, 0.0
      %v1558 = vmax.f32 %v1550, 0.0
      %v1559 = vmax.f32 %v1551, 0.0
      %v1560 = vmax.f32 %v1552, 0.0
      %1561 = vrot.lane.b32.xlu0 %v485, 116
      %v1562 = vpop.permute.xlu0 %1561
      %1563 = vrot.lane.b32.xlu0 %v486, 116
      %v1564 = vpop.permute.xlu0 %1563
      %1565 = vrot.lane.b32.xlu0 %v487, 116
      %v1566 = vpop.permute.xlu0 %1565
      %1567 = vrot.lane.b32.xlu0 %v488, 116
      %v1568 = vpop.permute.xlu0 %1567
      %1569 = vrot.lane.b32.xlu0 %v489, 116
      %v1570 = vpop.permute.xlu0 %1569
      %1571 = vrot.lane.b32.xlu0 %v490, 116
      %v1572 = vpop.permute.xlu0 %1571
      %1573 = vrot.lane.b32.xlu0 %v491, 116
      %v1574 = vpop.permute.xlu0 %1573
      %1575 = vrot.lane.b32.xlu0 %v492, 116
      %v1576 = vpop.permute.xlu0 %1575
      %v1585 = vadd.f32 %v1553, %v1562
      %v1586 = vadd.f32 %v1554, %v1564
      %v1587 = vadd.f32 %v1555, %v1566
      %v1588 = vadd.f32 %v1556, %v1568
      %v1589 = vadd.f32 %v1557, %v1570
      %v1590 = vadd.f32 %v1558, %v1572
      %v1591 = vadd.f32 %v1559, %v1574
      %v1592 = vadd.f32 %v1560, %v1576
      %1593 = vst.msk [vmem:[%s532 + $0x1] sm:$0xff] %vm363, %v1585
      %1594 = vst.msk [vmem:[%s532 + $0x11] sm:$0xff] %vm363, %v1586
      %1595 = vst.msk [vmem:[%s532 + $0x21] sm:$0xff] %vm363, %v1587
      %1596 = vst.msk [vmem:[%s532 + $0x31] sm:$0xff] %vm363, %v1588
      %1597 = vst.msk [vmem:[%s532 + $0x41] sm:$0xff] %vm363, %v1589
      %1598 = vst.msk [vmem:[%s532 + $0x51] sm:$0xff] %vm363, %v1590
      %1599 = vst.msk [vmem:[%s532 + $0x61] sm:$0xff] %vm363, %v1591
      %1600 = vst.msk [vmem:[%s532 + $0x71] sm:$0xff] %vm363, %v1592
      %v1601 = vld [vmem:[#allocation2] sm:$0xff]
      %v1602 = vld [vmem:[#allocation2 + $0x10] sm:$0xff]
      %v1603 = vld [vmem:[#allocation2 + $0x20] sm:$0xff]
      %v1604 = vld [vmem:[#allocation2 + $0x30] sm:$0xff]
      %v1605 = vld [vmem:[#allocation2 + $0x40] sm:$0xff]
      %v1606 = vld [vmem:[#allocation2 + $0x50] sm:$0xff]
      %v1607 = vld [vmem:[#allocation2 + $0x60] sm:$0xff]
      %v1608 = vld [vmem:[#allocation2 + $0x70] sm:$0xff]
      %v1609 = vld [vmem:[#allocation2 + $0x1] sm:$0xff]
      %v1610 = vld [vmem:[#allocation2 + $0x11] sm:$0xff]
      %v1611 = vld [vmem:[#allocation2 + $0x21] sm:$0xff]
      %v1612 = vld [vmem:[#allocation2 + $0x31] sm:$0xff]
      %v1613 = vld [vmem:[#allocation2 + $0x41] sm:$0xff]
      %v1614 = vld [vmem:[#allocation2 + $0x51] sm:$0xff]
      %v1615 = vld [vmem:[#allocation2 + $0x61] sm:$0xff]
      %v1616 = vld [vmem:[#allocation2 + $0x71] sm:$0xff]
      %v1617 = vld [vmem:[#allocation2 + $0x2] sm:$0xff]
      %v1618 = vld [vmem:[#allocation2 + $0x12] sm:$0xff]
      %v1619 = vld [vmem:[#allocation2 + $0x22] sm:$0xff]
      %v1620 = vld [vmem:[#allocation2 + $0x32] sm:$0xff]
      %v1621 = vld [vmem:[#allocation2 + $0x42] sm:$0xff]
      %v1622 = vld [vmem:[#allocation2 + $0x52] sm:$0xff]
      %v1623 = vld [vmem:[#allocation2 + $0x62] sm:$0xff]
      %v1624 = vld [vmem:[#allocation2 + $0x72] sm:$0xff]
      %v1625 = vld [vmem:[%s532] sm:$0xff]
      %v1626 = vld [vmem:[%s532 + $0x10] sm:$0xff]
      %v1627 = vld [vmem:[%s532 + $0x20] sm:$0xff]
      %v1628 = vld [vmem:[%s532 + $0x30] sm:$0xff]
      %v1629 = vld [vmem:[%s532 + $0x40] sm:$0xff]
      %v1630 = vld [vmem:[%s532 + $0x50] sm:$0xff]
      %v1631 = vld [vmem:[%s532 + $0x60] sm:$0xff]
      %v1632 = vld [vmem:[%s532 + $0x70] sm:$0xff]
      %v1633 = vld [vmem:[%s532 + $0x1] sm:$0xff]
      %v1634 = vld [vmem:[%s532 + $0x11] sm:$0xff]
      %v1635 = vld [vmem:[%s532 + $0x21] sm:$0xff]
      %v1636 = vld [vmem:[%s532 + $0x31] sm:$0xff]
      %v1637 = vld [vmem:[%s532 + $0x41] sm:$0xff]
      %v1638 = vld [vmem:[%s532 + $0x51] sm:$0xff]
      %v1639 = vld [vmem:[%s532 + $0x61] sm:$0xff]
      %v1640 = vld [vmem:[%s532 + $0x71] sm:$0xff]
      %v1641 = vld [vmem:[%s532 + $0x2] sm:$0xff]
      %v1642 = vld [vmem:[%s532 + $0x12] sm:$0xff]
      %v1643 = vld [vmem:[%s532 + $0x22] sm:$0xff]
      %v1644 = vld [vmem:[%s532 + $0x32] sm:$0xff]
      %v1645 = vld [vmem:[%s532 + $0x42] sm:$0xff]
      %v1646 = vld [vmem:[%s532 + $0x52] sm:$0xff]
      %v1647 = vld [vmem:[%s532 + $0x62] sm:$0xff]
      %v1648 = vld [vmem:[%s532 + $0x72] sm:$0xff]
      %v1649 = vld [vmem:[%s589] sm:$0xff]
      %v1650 = vld [vmem:[%s589 + $0x10] sm:$0xff]
      %v1651 = vld [vmem:[%s589 + $0x20] sm:$0xff]
      %v1652 = vld [vmem:[%s589 + $0x30] sm:$0xff]
      %v1653 = vld [vmem:[%s589 + $0x40] sm:$0xff]
      %v1654 = vld [vmem:[%s589 + $0x50] sm:$0xff]
      %v1655 = vld [vmem:[%s589 + $0x60] sm:$0xff]
      %v1656 = vld [vmem:[%s589 + $0x70] sm:$0xff]
      %v1657 = vld [vmem:[%s589 + $0x1] sm:$0xff]
      %v1658 = vld [vmem:[%s589 + $0x11] sm:$0xff]
      %v1659 = vld [vmem:[%s589 + $0x21] sm:$0xff]
      %v1660 = vld [vmem:[%s589 + $0x31] sm:$0xff]
      %v1661 = vld [vmem:[%s589 + $0x41] sm:$0xff]
      %v1662 = vld [vmem:[%s589 + $0x51] sm:$0xff]
      %v1663 = vld [vmem:[%s589 + $0x61] sm:$0xff]
      %v1664 = vld [vmem:[%s589 + $0x71] sm:$0xff]
      %v1665 = vld [vmem:[%s589 + $0x2] sm:$0xff]
      %v1666 = vld [vmem:[%s589 + $0x12] sm:$0xff]
      %v1667 = vld [vmem:[%s589 + $0x22] sm:$0xff]
      %v1668 = vld [vmem:[%s589 + $0x32] sm:$0xff]
      %v1669 = vld [vmem:[%s589 + $0x42] sm:$0xff]
      %v1670 = vld [vmem:[%s589 + $0x52] sm:$0xff]
      %v1671 = vld [vmem:[%s589 + $0x62] sm:$0xff]
      %v1672 = vld [vmem:[%s589 + $0x72] sm:$0xff]
      %1681 = vrot.lane.b32.xlu0 %v1609, 4
      %v1682 = vpop.permute.xlu0 %1681
      %1683 = vrot.lane.b32.xlu0 %v1610, 4
      %v1684 = vpop.permute.xlu0 %1683
      %1685 = vrot.lane.b32.xlu0 %v1611, 4
      %v1686 = vpop.permute.xlu0 %1685
      %1687 = vrot.lane.b32.xlu0 %v1612, 4
      %v1688 = vpop.permute.xlu0 %1687
      %1689 = vrot.lane.b32.xlu0 %v1613, 4
      %v1690 = vpop.permute.xlu0 %1689
      %1691 = vrot.lane.b32.xlu0 %v1614, 4
      %v1692 = vpop.permute.xlu0 %1691
      %1693 = vrot.lane.b32.xlu0 %v1615, 4
      %v1694 = vpop.permute.xlu0 %1693
      %1695 = vrot.lane.b32.xlu0 %v1616, 4
      %v1696 = vpop.permute.xlu0 %1695
      %1713 = vrot.lane.b32.xlu0 %v1617, 8
      %v1714 = vpop.permute.xlu0 %1713
      %1715 = vrot.lane.b32.xlu0 %v1618, 8
      %v1716 = vpop.permute.xlu0 %1715
      %1717 = vrot.lane.b32.xlu0 %v1619, 8
      %v1718 = vpop.permute.xlu0 %1717
      %1719 = vrot.lane.b32.xlu0 %v1620, 8
      %v1720 = vpop.permute.xlu0 %1719
      %1721 = vrot.lane.b32.xlu0 %v1621, 8
      %v1722 = vpop.permute.xlu0 %1721
      %1723 = vrot.lane.b32.xlu0 %v1622, 8
      %v1724 = vpop.permute.xlu0 %1723
      %1725 = vrot.lane.b32.xlu0 %v1623, 8
      %v1726 = vpop.permute.xlu0 %1725
      %1727 = vrot.lane.b32.xlu0 %v1624, 8
      %v1728 = vpop.permute.xlu0 %1727
      %1745 = vrot.lane.b32.xlu0 %v1625, 12
      %v1746 = vpop.permute.xlu0 %1745
      %1747 = vrot.lane.b32.xlu0 %v1626, 12
      %v1748 = vpop.permute.xlu0 %1747
      %1749 = vrot.lane.b32.xlu0 %v1627, 12
      %v1750 = vpop.permute.xlu0 %1749
      %1751 = vrot.lane.b32.xlu0 %v1628, 12
      %v1752 = vpop.permute.xlu0 %1751
      %1753 = vrot.lane.b32.xlu0 %v1629, 12
      %v1754 = vpop.permute.xlu0 %1753
      %1755 = vrot.lane.b32.xlu0 %v1630, 12
      %v1756 = vpop.permute.xlu0 %1755
      %1757 = vrot.lane.b32.xlu0 %v1631, 12
      %v1758 = vpop.permute.xlu0 %1757
      %1759 = vrot.lane.b32.xlu0 %v1632, 12
      %v1760 = vpop.permute.xlu0 %1759
      %1777 = vrot.lane.b32.xlu0 %v1633, 16
      %v1778 = vpop.permute.xlu0 %1777
      %1779 = vrot.lane.b32.xlu0 %v1634, 16
      %v1780 = vpop.permute.xlu0 %1779
      %1781 = vrot.lane.b32.xlu0 %v1635, 16
      %v1782 = vpop.permute.xlu0 %1781
      %1783 = vrot.lane.b32.xlu0 %v1636, 16
      %v1784 = vpop.permute.xlu0 %1783
      %1785 = vrot.lane.b32.xlu0 %v1637, 16
      %v1786 = vpop.permute.xlu0 %1785
      %1787 = vrot.lane.b32.xlu0 %v1638, 16
      %v1788 = vpop.permute.xlu0 %1787
      %1789 = vrot.lane.b32.xlu0 %v1639, 16
      %v1790 = vpop.permute.xlu0 %1789
      %1791 = vrot.lane.b32.xlu0 %v1640, 16
      %v1792 = vpop.permute.xlu0 %1791
      %1809 = vrot.lane.b32.xlu0 %v1641, 20
      %v1810 = vpop.permute.xlu0 %1809
      %1811 = vrot.lane.b32.xlu0 %v1642, 20
      %v1812 = vpop.permute.xlu0 %1811
      %1813 = vrot.lane.b32.xlu0 %v1643, 20
      %v1814 = vpop.permute.xlu0 %1813
      %1815 = vrot.lane.b32.xlu0 %v1644, 20
      %v1816 = vpop.permute.xlu0 %1815
      %1817 = vrot.lane.b32.xlu0 %v1645, 20
      %v1818 = vpop.permute.xlu0 %1817
      %1819 = vrot.lane.b32.xlu0 %v1646, 20
      %v1820 = vpop.permute.xlu0 %1819
      %1821 = vrot.lane.b32.xlu0 %v1647, 20
      %v1822 = vpop.permute.xlu0 %1821
      %1823 = vrot.lane.b32.xlu0 %v1648, 20
      %v1824 = vpop.permute.xlu0 %1823
      %1841 = vrot.lane.b32.xlu0 %v1649, 24
      %v1842 = vpop.permute.xlu0 %1841
      %1843 = vrot.lane.b32.xlu0 %v1650, 24
      %v1844 = vpop.permute.xlu0 %1843
      %1845 = vrot.lane.b32.xlu0 %v1651, 24
      %v1846 = vpop.permute.xlu0 %1845
      %1847 = vrot.lane.b32.xlu0 %v1652, 24
      %v1848 = vpop.permute.xlu0 %1847
      %1849 = vrot.lane.b32.xlu0 %v1653, 24
      %v1850 = vpop.permute.xlu0 %1849
      %1851 = vrot.lane.b32.xlu0 %v1654, 24
      %v1852 = vpop.permute.xlu0 %1851
      %1853 = vrot.lane.b32.xlu0 %v1655, 24
      %v1854 = vpop.permute.xlu0 %1853
      %1855 = vrot.lane.b32.xlu0 %v1656, 24
      %v1856 = vpop.permute.xlu0 %1855
      %1873 = vrot.lane.b32.xlu0 %v1657, 28
      %v1874 = vpop.permute.xlu0 %1873
      %1875 = vrot.lane.b32.xlu0 %v1658, 28
      %v1876 = vpop.permute.xlu0 %1875
      %1877 = vrot.lane.b32.xlu0 %v1659, 28
      %v1878 = vpop.permute.xlu0 %1877
      %1879 = vrot.lane.b32.xlu0 %v1660, 28
      %v1880 = vpop.permute.xlu0 %1879
      %1881 = vrot.lane.b32.xlu0 %v1661, 28
      %v1882 = vpop.permute.xlu0 %1881
      %1883 = vrot.lane.b32.xlu0 %v1662, 28
      %v1884 = vpop.permute.xlu0 %1883
      %1885 = vrot.lane.b32.xlu0 %v1663, 28
      %v1886 = vpop.permute.xlu0 %1885
      %1887 = vrot.lane.b32.xlu0 %v1664, 28
      %v1888 = vpop.permute.xlu0 %1887
      %1905 = vrot.lane.b32.xlu0 %v1665, 32
      %v1906 = vpop.permute.xlu0 %1905
      %1907 = vrot.lane.b32.xlu0 %v1666, 32
      %v1908 = vpop.permute.xlu0 %1907
      %1909 = vrot.lane.b32.xlu0 %v1667, 32
      %v1910 = vpop.permute.xlu0 %1909
      %1911 = vrot.lane.b32.xlu0 %v1668, 32
      %v1912 = vpop.permute.xlu0 %1911
      %1913 = vrot.lane.b32.xlu0 %v1669, 32
      %v1914 = vpop.permute.xlu0 %1913
      %1915 = vrot.lane.b32.xlu0 %v1670, 32
      %v1916 = vpop.permute.xlu0 %1915
      %1917 = vrot.lane.b32.xlu0 %v1671, 32
      %v1918 = vpop.permute.xlu0 %1917
      %1919 = vrot.lane.b32.xlu0 %v1672, 32
      %v1920 = vpop.permute.xlu0 %1919
      %v1929 = vsel %vm363, %v1601, %v1682
      %v1930 = vsel %vm363, %v1602, %v1684
      %v1931 = vsel %vm363, %v1603, %v1686
      %v1932 = vsel %vm363, %v1604, %v1688
      %v1933 = vsel %vm363, %v1605, %v1690
      %v1934 = vsel %vm363, %v1606, %v1692
      %v1935 = vsel %vm363, %v1607, %v1694
      %v1936 = vsel %vm363, %v1608, %v1696
      %v1937 = vsel %vm878, %v1929, %v1714
      %v1938 = vsel %vm878, %v1930, %v1716
      %v1939 = vsel %vm878, %v1931, %v1718
      %v1940 = vsel %vm878, %v1932, %v1720
      %v1941 = vsel %vm878, %v1933, %v1722
      %v1942 = vsel %vm878, %v1934, %v1724
      %v1943 = vsel %vm878, %v1935, %v1726
      %v1944 = vsel %vm878, %v1936, %v1728
      %v1945 = vsel %vm887, %v1937, %v1746
      %v1946 = vsel %vm887, %v1938, %v1748
      %v1947 = vsel %vm887, %v1939, %v1750
      %v1948 = vsel %vm887, %v1940, %v1752
      %v1949 = vsel %vm887, %v1941, %v1754
      %v1950 = vsel %vm887, %v1942, %v1756
      %v1951 = vsel %vm887, %v1943, %v1758
      %v1952 = vsel %vm887, %v1944, %v1760
      %v1953 = vsel %vm395, %v1945, %v1778
      %v1954 = vsel %vm395, %v1946, %v1780
      %v1955 = vsel %vm395, %v1947, %v1782
      %v1956 = vsel %vm395, %v1948, %v1784
      %v1957 = vsel %vm395, %v1949, %v1786
      %v1958 = vsel %vm395, %v1950, %v1788
      %v1959 = vsel %vm395, %v1951, %v1790
      %v1960 = vsel %vm395, %v1952, %v1792
      %v1961 = vsel %vm904, %v1953, %v1810
      %v1962 = vsel %vm904, %v1954, %v1812
      %v1963 = vsel %vm904, %v1955, %v1814
      %v1964 = vsel %vm904, %v1956, %v1816
      %v1965 = vsel %vm904, %v1957, %v1818
      %v1966 = vsel %vm904, %v1958, %v1820
      %v1967 = vsel %vm904, %v1959, %v1822
      %v1968 = vsel %vm904, %v1960, %v1824
      %v1969 = vsel %vm913, %v1961, %v1842
      %v1970 = vsel %vm913, %v1962, %v1844
      %v1971 = vsel %vm913, %v1963, %v1846
      %v1972 = vsel %vm913, %v1964, %v1848
      %v1973 = vsel %vm913, %v1965, %v1850
      %v1974 = vsel %vm913, %v1966, %v1852
      %v1975 = vsel %vm913, %v1967, %v1854
      %v1976 = vsel %vm913, %v1968, %v1856
      %v1977 = vsel %vm922, %v1969, %v1874
      %v1978 = vsel %vm922, %v1970, %v1876
      %v1979 = vsel %vm922, %v1971, %v1878
      %v1980 = vsel %vm922, %v1972, %v1880
      %v1981 = vsel %vm922, %v1973, %v1882
      %v1982 = vsel %vm922, %v1974, %v1884
      %v1983 = vsel %vm922, %v1975, %v1886
      %v1984 = vsel %vm922, %v1976, %v1888
      %v1985 = vsel %vm931, %v1977, %v1906
      %v1986 = vsel %vm931, %v1978, %v1908
      %v1987 = vsel %vm931, %v1979, %v1910
      %v1988 = vsel %vm931, %v1980, %v1912
      %v1989 = vsel %vm931, %v1981, %v1914
      %v1990 = vsel %vm931, %v1982, %v1916
      %v1991 = vsel %vm931, %v1983, %v1918
      %v1992 = vsel %vm931, %v1984, %v1920
      %v1994 = vsel %vm940, %v1985, 0
      %v1997 = vsel %vm940, %v1986, 0
      %v2000 = vsel %vm940, %v1987, 0
      %v2003 = vsel %vm940, %v1988, 0
      %v2006 = vsel %vm940, %v1989, 0
      %v2009 = vsel %vm940, %v1990, 0
      %v2012 = vsel %vm940, %v1991, 0
      %v2015 = vsel %vm940, %v1992, 0
      %2017 = vmatpush.msra.mxu0 0.0
      %2018 = vmatpush.msra.mxu0 0.0
      %2019 = vmatpush.msra.mxu0 0.0
      %2020 = vmatpush.msra.mxu0 0.0
      %2021 = vmatpush.msra.mxu0 0.0
      %2022 = vmatpush.msra.mxu0 0.0
      %2023 = vmatpush.msra.mxu0 0.0
      %2024 = vmatpush.msra.mxu0 0.0
      %2025 = vmatpush.msra.mxu0 0.0
      %2026 = vmatpush.msra.mxu0 0.0
      %2027 = vmatpush.msra.mxu0 0.0
      %2028 = vmatpush.msra.mxu0 %v967
      %2029 = vmatpush.msra.mxu0 %v498
      %2030 = vmatpush.msra.mxu0 %v497
      %2031 = vmatpush.msra.mxu0 %v496
      %2032 = vmatpush.msra.mxu0 %v495
      %2033 = vmatmul.f32.gmra.mxu0 %v1994
      %v2034 = vpop.f32.mrf.mxu0
      %v2035 = vadd.f32 0.0, %v2034
      %2036 = vmatmul.f32.gmra.mxu0 %v1997
      %v2037 = vpop.f32.mrf.mxu0
      %v2038 = vadd.f32 0.0, %v2037
      %2039 = vmatmul.f32.gmra.mxu0 %v2000
      %v2040 = vpop.f32.mrf.mxu0
      %v2041 = vadd.f32 0.0, %v2040
      %2042 = vmatmul.f32.gmra.mxu0 %v2003
      %v2043 = vpop.f32.mrf.mxu0
      %v2044 = vadd.f32 0.0, %v2043
      %2045 = vmatmul.f32.gmra.mxu0 %v2006
      %v2046 = vpop.f32.mrf.mxu0
      %v2047 = vadd.f32 0.0, %v2046
      %2048 = vmatmul.f32.gmra.mxu0 %v2009
      %v2049 = vpop.f32.mrf.mxu0
      %v2050 = vadd.f32 0.0, %v2049
      %2051 = vmatmul.f32.gmra.mxu0 %v2012
      %v2052 = vpop.f32.mrf.mxu0
      %v2053 = vadd.f32 0.0, %v2052
      %2054 = vmatmul.f32.gmra.mxu0 %v2015
      %v2055 = vpop.f32.mrf.mxu0
      %v2056 = vadd.f32 0.0, %v2055
      %2057 = vdwg.mxu0
      %v2058 = vmul.f32 %v2035, %v1011
      %v2059 = vmul.f32 %v2038, %v1011
      %v2060 = vmul.f32 %v2041, %v1011
      %v2061 = vmul.f32 %v2044, %v1011
      %v2062 = vmul.f32 %v2047, %v1011
      %v2063 = vmul.f32 %v2050, %v1011
      %v2064 = vmul.f32 %v2053, %v1011
      %v2065 = vmul.f32 %v2056, %v1011
      %v2066 = vadd.f32 %v2058, %v1022
      %v2067 = vadd.f32 %v2059, %v1022
      %v2068 = vadd.f32 %v2060, %v1022
      %v2069 = vadd.f32 %v2061, %v1022
      %v2070 = vadd.f32 %v2062, %v1022
      %v2071 = vadd.f32 %v2063, %v1022
      %v2072 = vadd.f32 %v2064, %v1022
      %v2073 = vadd.f32 %v2065, %v1022
      %v2074 = vmax.f32 %v2066, 0.0
      %v2075 = vmax.f32 %v2067, 0.0
      %v2076 = vmax.f32 %v2068, 0.0
      %v2077 = vmax.f32 %v2069, 0.0
      %v2078 = vmax.f32 %v2070, 0.0
      %v2079 = vmax.f32 %v2071, 0.0
      %v2080 = vmax.f32 %v2072, 0.0
      %v2081 = vmax.f32 %v2073, 0.0
      %2090 = vrot.lane.b32.xlu0 %v1032, 4
      %v2091 = vpop.permute.xlu0 %2090
      %2092 = vrot.lane.b32.xlu0 %v1033, 4
      %v2093 = vpop.permute.xlu0 %2092
      %2094 = vrot.lane.b32.xlu0 %v1034, 4
      %v2095 = vpop.permute.xlu0 %2094
      %2096 = vrot.lane.b32.xlu0 %v1035, 4
      %v2097 = vpop.permute.xlu0 %2096
      %2098 = vrot.lane.b32.xlu0 %v1036, 4
      %v2099 = vpop.permute.xlu0 %2098
      %2100 = vrot.lane.b32.xlu0 %v1037, 4
      %v2101 = vpop.permute.xlu0 %2100
      %2102 = vrot.lane.b32.xlu0 %v1038, 4
      %v2103 = vpop.permute.xlu0 %2102
      %2104 = vrot.lane.b32.xlu0 %v1039, 4
      %v2105 = vpop.permute.xlu0 %2104
      %2122 = vrot.lane.b32.xlu0 %v1553, 8
      %v2123 = vpop.permute.xlu0 %2122
      %2124 = vrot.lane.b32.xlu0 %v1554, 8
      %v2125 = vpop.permute.xlu0 %2124
      %2126 = vrot.lane.b32.xlu0 %v1555, 8
      %v2127 = vpop.permute.xlu0 %2126
      %2128 = vrot.lane.b32.xlu0 %v1556, 8
      %v2129 = vpop.permute.xlu0 %2128
      %2130 = vrot.lane.b32.xlu0 %v1557, 8
      %v2131 = vpop.permute.xlu0 %2130
      %2132 = vrot.lane.b32.xlu0 %v1558, 8
      %v2133 = vpop.permute.xlu0 %2132
      %2134 = vrot.lane.b32.xlu0 %v1559, 8
      %v2135 = vpop.permute.xlu0 %2134
      %2136 = vrot.lane.b32.xlu0 %v1560, 8
      %v2137 = vpop.permute.xlu0 %2136
      %2154 = vrot.lane.b32.xlu0 %v2074, 12
      %v2155 = vpop.permute.xlu0 %2154
      %2156 = vrot.lane.b32.xlu0 %v2075, 12
      %v2157 = vpop.permute.xlu0 %2156
      %2158 = vrot.lane.b32.xlu0 %v2076, 12
      %v2159 = vpop.permute.xlu0 %2158
      %2160 = vrot.lane.b32.xlu0 %v2077, 12
      %v2161 = vpop.permute.xlu0 %2160
      %2162 = vrot.lane.b32.xlu0 %v2078, 12
      %v2163 = vpop.permute.xlu0 %2162
      %2164 = vrot.lane.b32.xlu0 %v2079, 12
      %v2165 = vpop.permute.xlu0 %2164
      %2166 = vrot.lane.b32.xlu0 %v2080, 12
      %v2167 = vpop.permute.xlu0 %2166
      %2168 = vrot.lane.b32.xlu0 %v2081, 12
      %v2169 = vpop.permute.xlu0 %2168
      %v2178 = vsel %vm363, %v485, %v2091
      %v2179 = vsel %vm363, %v486, %v2093
      %v2180 = vsel %vm363, %v487, %v2095
      %v2181 = vsel %vm363, %v488, %v2097
      %v2182 = vsel %vm363, %v489, %v2099
      %v2183 = vsel %vm363, %v490, %v2101
      %v2184 = vsel %vm363, %v491, %v2103
      %v2185 = vsel %vm363, %v492, %v2105
      %v2186 = vsel %vm878, %v2178, %v2123
      %v2187 = vsel %vm878, %v2179, %v2125
      %v2188 = vsel %vm878, %v2180, %v2127
      %v2189 = vsel %vm878, %v2181, %v2129
      %v2190 = vsel %vm878, %v2182, %v2131
      %v2191 = vsel %vm878, %v2183, %v2133
      %v2192 = vsel %vm878, %v2184, %v2135
      %v2193 = vsel %vm878, %v2185, %v2137
      %v2194 = vsel %vm887, %v2186, %v2155
      %v2195 = vsel %vm887, %v2187, %v2157
      %v2196 = vsel %vm887, %v2188, %v2159
      %v2197 = vsel %vm887, %v2189, %v2161
      %v2198 = vsel %vm887, %v2190, %v2163
      %v2199 = vsel %vm887, %v2191, %v2165
      %v2200 = vsel %vm887, %v2192, %v2167
      %v2201 = vsel %vm887, %v2193, %v2169
      %v2202 = vld [vmem:[%s7] sm:$0xff]
      %v2203 = vld [vmem:[%s7 + $0x8] sm:$0xff]
      %v2205 = vsel %vm395, %v2194, 0
      %v2208 = vsel %vm395, %v2195, 0
      %v2211 = vsel %vm395, %v2196, 0
      %v2214 = vsel %vm395, %v2197, 0
      %v2217 = vsel %vm395, %v2198, 0
      %v2220 = vsel %vm395, %v2199, 0
      %v2223 = vsel %vm395, %v2200, 0
      %v2226 = vsel %vm395, %v2201, 0
      %2228 = vmatpush.msra.mxu0 0.0
      %2229 = vmatpush.msra.mxu0 0.0
      %2230 = vmatpush.msra.mxu0 0.0
      %2231 = vmatpush.msra.mxu0 0.0
      %2232 = vmatpush.msra.mxu0 0.0
      %2233 = vmatpush.msra.mxu0 0.0
      %2234 = vmatpush.msra.mxu0 0.0
      %2235 = vmatpush.msra.mxu0 0.0
      %2236 = vmatpush.msra.mxu0 0.0
      %2237 = vmatpush.msra.mxu0 0.0
      %2238 = vmatpush.msra.mxu0 0.0
      %2239 = vmatpush.msra.mxu0 0.0
      %2240 = vmatpush.msra.mxu0 0.0
      %2241 = vmatpush.msra.mxu0 0.0
      %2242 = vmatpush.msra.mxu0 %v2203
      %2243 = vmatpush.msra.mxu0 %v2202
      %2244 = vmatmul.f32.gmra.mxu0 %v2205
      %v2245 = vpop.f32.mrf.mxu0
      %v2246 = vadd.f32 0.0, %v2245
      %2247 = vmatmul.f32.gmra.mxu0 %v2208
      %v2248 = vpop.f32.mrf.mxu0
      %v2249 = vadd.f32 0.0, %v2248
      %2250 = vmatmul.f32.gmra.mxu0 %v2211
      %v2251 = vpop.f32.mrf.mxu0
      %v2252 = vadd.f32 0.0, %v2251
      %2253 = vmatmul.f32.gmra.mxu0 %v2214
      %v2254 = vpop.f32.mrf.mxu0
      %v2255 = vadd.f32 0.0, %v2254
      %2256 = vmatmul.f32.gmra.mxu0 %v2217
      %v2257 = vpop.f32.mrf.mxu0
      %v2258 = vadd.f32 0.0, %v2257
      %2259 = vmatmul.f32.gmra.mxu0 %v2220
      %v2260 = vpop.f32.mrf.mxu0
      %v2261 = vadd.f32 0.0, %v2260
      %2262 = vmatmul.f32.gmra.mxu0 %v2223
      %v2263 = vpop.f32.mrf.mxu0
      %v2264 = vadd.f32 0.0, %v2263
      %2265 = vmatmul.f32.gmra.mxu0 %v2226
      %v2266 = vpop.f32.mrf.mxu0
      %v2267 = vadd.f32 0.0, %v2266
      %2268 = vdwg.mxu0
      %v2269 = vld [vmem:[%s8] sm:$0x1]
      %v2271 = vperm.slane %v2269, 0
      %v2273 = vmul.f32 %v2246, %v2271
      %v2274 = vmul.f32 %v2249, %v2271
      %v2275 = vmul.f32 %v2252, %v2271
      %v2276 = vmul.f32 %v2255, %v2271
      %v2277 = vmul.f32 %v2258, %v2271
      %v2278 = vmul.f32 %v2261, %v2271
      %v2279 = vmul.f32 %v2264, %v2271
      %v2280 = vmul.f32 %v2267, %v2271
      %v2281 = vld [vmem:[%s9] sm:$0x1]
      %v2283 = vperm.slane %v2281, 0
      %v2285 = vadd.f32 %v2273, %v2283
      %v2286 = vadd.f32 %v2274, %v2283
      %v2287 = vadd.f32 %v2275, %v2283
      %v2288 = vadd.f32 %v2276, %v2283
      %v2289 = vadd.f32 %v2277, %v2283
      %v2290 = vadd.f32 %v2278, %v2283
      %v2291 = vadd.f32 %v2279, %v2283
      %v2292 = vadd.f32 %v2280, %v2283
      %vm2293 = vcmask 523264
      %2294 = vst.msk [vmem:[%s361] sm:$0xff] %vm2293, %v2285
      %2295 = vst.msk [vmem:[%s361 + $0x8] sm:$0xff] %vm2293, %v2286
      %2296 = vst.msk [vmem:[%s361 + $0x10] sm:$0xff] %vm2293, %v2287
      %2297 = vst.msk [vmem:[%s361 + $0x18] sm:$0xff] %vm2293, %v2288
      %2298 = vst.msk [vmem:[%s361 + $0x20] sm:$0xff] %vm2293, %v2289
      %2299 = vst.msk [vmem:[%s361 + $0x28] sm:$0xff] %vm2293, %v2290
      %2300 = vst.msk [vmem:[%s361 + $0x30] sm:$0xff] %vm2293, %v2291
      %2301 = vst.msk [vmem:[%s361 + $0x38] sm:$0xff] %vm2293, %v2292
      %s2302 = smul.u32 8, %s21
      %p2303 = scmp.lt.s32.totalorder %s2302, 15
      %s2304 = scalar_select %p2303, %s2302, 15
      %s2305 = smul.addr %s2304, 8
      %s2306 = scalar_lea.vmem %s10, %s2305
      // Predicated region
      $region61: #{tpu_custom_call.1} parent=59 // pred_check
        %p2307 = pneg %p254
      $region62: #{tpu_custom_call.1} parent=59 // pred_check_branch
        %2309 = sbr.rel (%p2307) target = $region64
      $region63: #{tpu_custom_call.1} parent=59 // pred_region
        %s2310 = smul.u32 8, %s21
      $region64: #{tpu_custom_call.1} parent=59 // pred_fallthru
        _
    $region60: #{tpu_custom_call.1} parent=5 // pred_fallthru
      _
    %p2311 = scmp.le.s32.totalorder 2, %s16
    // Predicated region
    $region65: #{tpu_custom_call.1} parent=5 // pred_check
      %p2312 = pneg %p2311
    $region66: #{tpu_custom_call.1} parent=5 // pred_check_branch
      %2314 = sbr.rel (%p2312) target = $region68
    $region67: #{tpu_custom_call.1} parent=5 // pred_region
      %s2315 = ssub.s32 %s16, 2
      // Predicated region
      $region69: #{tpu_custom_call.1} parent=67 // pred_check
        %p2316 = pneg %p260
      $region70: #{tpu_custom_call.1} parent=67 // pred_check_branch
        %2318 = sbr.rel (%p2316) target = $region72
      $region71: #{tpu_custom_call.1} parent=67 // pred_region
        %s2319 = smul.u32 8, %s22
        %p2320 = scmp.lt.s32.totalorder %s2319, 15
        %s2321 = scalar_select %p2320, %s2319, 15
        %s2322 = smul.addr %s2321, 8
        %s2323 = scalar_lea.vmem %s10, %s2322
      $region72: #{tpu_custom_call.1} parent=67 // pred_fallthru
        _
    $region68: #{tpu_custom_call.1} parent=5 // pred_fallthru
      _
  $region6: #{tpu_custom_call.1} parent=0 // loop_footer
    %s20 = sadd.s32 1, %s16
  $region7: #{tpu_custom_call.1} parent=0 // loop_footer_branch
    %15 = sbr.rel target = $region3
  $region8: #{tpu_custom_call.1} parent=0 // loop_exit
    _

</llo_original>
